<compile_context>
chip_gen: v7x
topology: tpu7x:2x2x1
jax: 0.10.0
libtpu: 0.0.40
codegen_flags: <defaults>
</compile_context>

<pallas_src>
import jax
import jax.numpy as jnp
from jax.experimental import pallas as pl
from jax.experimental.pallas import tpu as pltpu

BN_EPS = 1e-5
# Keep the flattened [9*Cin, Cout] weight fully VMEM-resident below this size.
_WEIGHT_RESIDENT_BYTES = 8 * 1024 * 1024


# ---------------------------------------------------------------------------
# small static helpers
# ---------------------------------------------------------------------------
def _round_up(x, m):
    return (x + m - 1) // m * m


def _vmem_limit_bytes():
    """Chip-aware scoped-VMEM budget: ~3/4 of physical VMEM, capped at 96 MiB.

    Falls back to a v7x-safe 48 MiB if the hardware query is unavailable.
    """
    cap = 64 * 1024 * 1024
    try:
        cap = int(pltpu.get_tpu_info().vmem_capacity_bytes)
    except Exception:
        pass
    return max(32 * 1024 * 1024, min(cap * 3 // 4, 96 * 1024 * 1024))


def _tile_plan(total, block, mult, min_tiles=1):
    """Return (num_tiles, tile, padded_total) with tile % mult == 0,
    num_tiles * tile == padded_total >= total, and num_tiles >= min_tiles whenever
    `total` spans at least that many `mult` granules (keeps both v7x TensorCores
    busy on the 'parallel' M axis)."""
    padded = _round_up(max(total, mult), mult)
    n = max(min_tiles, -(-padded // block))
    n = min(n, padded // mult)
    tile = _round_up(-(-padded // n), mult)
    n = -(-padded // tile)
    return n, tile, n * tile


def _pick_block_m(tk, c_pad, vmem_limit):
    """Largest 256-aligned M tile whose double-buffered working set fits ~60% of
    the scoped-VMEM budget (headroom kept for compiler scratch)."""
    budget = int(vmem_limit * 0.6)
    fixed = 2 * tk * c_pad * 2 + 2 * (2 * c_pad * 4)       # weights (x2 buf) + stats
    per_row = 2 * tk * 2 + c_pad * 4 + 2 * c_pad * 2        # patches(x2) + f32 acc + bf16 y(x2)
    bm = (budget - fixed) // max(per_row, 1)
    return int(max(256, min(2048, (bm // 256) * 256)))


# ---------------------------------------------------------------------------
# Pass 1 kernel: tiled im2col-GEMM (bf16 MXU, f32 VMEM accumulator) + BN partials
# ---------------------------------------------------------------------------
def _conv_gemm_stats_kernel(p_ref, w_ref, y_ref, sum_ref, sq_ref, acc_ref):
    # p_ref:   [TM, TK]      bf16 im2col patch tile
    # w_ref:   [TK, Cpad]    bf16 flattened conv weight tile (resident when nk == 1)
    # y_ref:   [TM, Cpad]    bf16 pre-BN activations (written once, at the last K step)
    # sum_ref: [1, 1, Cpad]  f32 per-M-tile channel sums
    # sq_ref:  [1, 1, Cpad]  f32 per-M-tile channel sums of squares
    # acc_ref: [TM, Cpad]    f32 VMEM accumulator scratch
    k = pl.program_id(1)

    @pl.when(k == 0)
    def _init():
        acc_ref[...] = jnp.zeros_like(acc_ref)

    acc_ref[...] += jnp.dot(p_ref[...], w_ref[...],
                            preferred_element_type=jnp.float32)

    @pl.when(k == pl.num_programs(1) - 1)
    def _finalize():
        y = acc_ref[...]
        y_ref[...] = y.astype(y_ref.dtype)
        sum_ref[...] = jnp.sum(y, axis=0, keepdims=True)[None]
        sq_ref[...] = jnp.sum(y * y, axis=0, keepdims=True)[None]


def conv_gemm_stats_pallas(patches, w_flat, *, tm, tk, vmem_limit):
    m_pad, k_pad = patches.shape
    c_pad = w_flat.shape[1]
    nm, nk = m_pad // tm, k_pad // tk
    # Weight HBM traffic: fetched once when its block index is constant (nk == 1).
    w_bytes = w_flat.size * w_flat.dtype.itemsize * (1 if nk == 1 else nm)
    cost = pl.CostEstimate(
        flops=2 * m_pad * k_pad * c_pad,
        transcendentals=0,
        bytes_accessed=(patches.size * patches.dtype.itemsize + w_bytes
                        + m_pad * c_pad * 2 + 2 * nm * c_pad * 4))
    return pl.pallas_call(
        _conv_gemm_stats_kernel,
        out_shape=(jax.ShapeDtypeStruct((m_pad, c_pad), jnp.bfloat16),
                   jax.ShapeDtypeStruct((nm, 1, c_pad), jnp.float32),
                   jax.ShapeDtypeStruct((nm, 1, c_pad), jnp.float32)),
        grid=(nm, nk),
        in_specs=[
            pl.BlockSpec((tm, tk), lambda i, k: (i, k)),
            pl.BlockSpec((tk, c_pad), lambda i, k: (k, 0)),
        ],
        out_specs=(
            pl.BlockSpec((tm, c_pad), lambda i, k: (i, 0)),
            pl.BlockSpec((1, 1, c_pad), lambda i, k: (i, 0, 0)),
            pl.BlockSpec((1, 1, c_pad), lambda i, k: (i, 0, 0)),
        ),
        scratch_shapes=[pltpu.VMEM((tm, c_pad), jnp.float32)],
        compiler_params=pltpu.CompilerParams(
            dimension_semantics=("parallel", "arbitrary"),
            vmem_limit_bytes=vmem_limit),
        cost_estimate=cost,
    )(patches, w_flat)


# ---------------------------------------------------------------------------
# Pass 2 kernel: fused per-channel scale/shift (BatchNorm) + ReLU, tiled over M
# ---------------------------------------------------------------------------
def _bn_relu_kernel(y_ref, scale_ref, shift_ref, o_ref):
    o_ref[...] = jnp.maximum(
        y_ref[...].astype(jnp.float32) * scale_ref[...] + shift_ref[...],
        0.0).astype(o_ref.dtype)


def bn_relu_pallas(y, scale, shift, *, tm, out_dtype, vmem_limit):
    m_pad, c_pad = y.shape
    nm = m_pad // tm
    out_itemsize = jnp.dtype(out_dtype).itemsize
    cost = pl.CostEstimate(
        flops=3 * m_pad * c_pad, transcendentals=0,
        bytes_accessed=(m_pad * c_pad * y.dtype.itemsize + 2 * c_pad * 4
                        + m_pad * c_pad * out_itemsize))
    return pl.pallas_call(
        _bn_relu_kernel,
        out_shape=jax.ShapeDtypeStruct((m_pad, c_pad), out_dtype),
        grid=(nm,),
        in_specs=[
            pl.BlockSpec((tm, c_pad), lambda i: (i, 0)),
            pl.BlockSpec((1, c_pad), lambda i: (0, 0)),
            pl.BlockSpec((1, c_pad), lambda i: (0, 0)),
        ],
        out_specs=pl.BlockSpec((tm, c_pad), lambda i: (i, 0)),
        compiler_params=pltpu.CompilerParams(
            dimension_semantics=("parallel",),
            vmem_limit_bytes=vmem_limit),
        cost_estimate=cost,
    )(y, scale, shift)


# ---------------------------------------------------------------------------
# Host glue (NHWC): upsample / pad / concat / im2col / weight flatten / BN fold
# ---------------------------------------------------------------------------
def upsample_bilinear_x2_align_corners(x):  # x: NHWC
    N, H, W, C = x.shape
    Ho, Wo = 2 * H, 2 * W

    def coords(out_sz, in_sz):
        if out_sz == 1 or in_sz == 1:
            z = jnp.zeros((out_sz,), jnp.float32)
            zi = jnp.zeros((out_sz,), jnp.int32)
            return z, zi, zi
        src = jnp.arange(out_sz, dtype=jnp.float32) * (in_sz - 1) / (out_sz - 1)
        lo = jnp.floor(src).astype(jnp.int32)
        hi = jnp.minimum(lo + 1, in_sz - 1)
        return src - lo.astype(jnp.float32), lo, hi

    fy, y0, y1 = coords(Ho, H)
    fx, x0, x1 = coords(Wo, W)

    ra = x[:, y0, :, :]
    rb = x[:, y1, :, :]
    row = ra * (1.0 - fy)[None, :, None, None] + rb * fy[None, :, None, None]
    ca = row[:, :, x0, :]
    cb = row[:, :, x1, :]
    return ca * (1.0 - fx)[None, None, :, None] + cb * fx[None, None, :, None]


def pad_like_torch(x1, x2):  # NHWC, matches F.pad([left, right, top, bottom])
    diffY = x2.shape[1] - x1.shape[1]
    diffX = x2.shape[2] - x1.shape[2]
    return jnp.pad(x1, ((0, 0),
                        (diffY // 2, diffY - diffY // 2),
                        (diffX // 2, diffX - diffX // 2),
                        (0, 0)))


def im2col_3x3_nhwc(x_nhwc):
    # -> bf16 patches [N*H*W, 9*Cin], K index = (ky*3+kx)*Cin + cin
    N, H, W, C = x_nhwc.shape
    x = x_nhwc.astype(jnp.bfloat16)
    xp = jnp.pad(x, ((0, 0), (1, 1), (1, 1), (0, 0)))
    cols = [xp[:, ky:ky + H, kx:kx + W, :] for ky in range(3) for kx in range(3)]
    return jnp.concatenate(cols, axis=-1).reshape(N * H * W, 9 * C)


def flatten_conv_weight(w_oihw):
    # [Cout, Cin, 3, 3] -> bf16 [9*Cin, Cout] matching the im2col ordering
    Cout, Cin, _, _ = w_oihw.shape
    return jnp.transpose(w_oihw, (2, 3, 1, 0)).reshape(9 * Cin, Cout).astype(jnp.bfloat16)


def bn_scale_shift(sum_c, sumsq_c, count, gamma, beta, eps=BN_EPS):
    # Training-mode (biased) batch statistics folded into one mul + one add.
    mean = sum_c / count
    var = jnp.maximum(sumsq_c / count - mean * mean, 0.0)
    scale = gamma * jax.lax.rsqrt(var + eps)
    shift = beta - mean * scale
    return scale, shift


def conv_bn_relu(x_nhwc, params, *, out_dtype, fused_epilogue,
                 block_m=None, block_k=2048):
    """3x3 conv (pad=1) + BatchNorm(train) + ReLU on an NHWC input.

    fused_epilogue=True  -> scale/shift+ReLU applied in jnp (XLA fuses it into the
                            consumer, e.g. the next layer's im2col); no pass-2 kernel.
    fused_epilogue=False -> lane-dense Pallas scale/shift+ReLU kernel writes the output.

    Note: the conv bias params['b'] is a mathematical no-op under training-mode BN
    (mean subtraction cancels it), so it is intentionally not applied.
    """
    n, h, w, cin = x_nhwc.shape
    cout = params["w"].shape[0]
    m, k = n * h * w, 9 * cin
    c_pad = _round_up(cout, 128)
    vmem_limit = _vmem_limit_bytes()

    patches = im2col_3x3_nhwc(x_nhwc)            # [M, 9*Cin] bf16
    w_flat = flatten_conv_weight(params["w"])    # [9*Cin, Cout] bf16

    # K plan: keep the flattened weight VMEM-resident (single K step, constant
    # block index, no K padding) when small; otherwise tile K in 128-chunks.
    if k * c_pad * 2 <= _WEIGHT_RESIDENT_BYTES:
        nk, tk, k_pad = 1, k, k
    else:
        nk, tk, k_pad = _tile_plan(k, block_k, 128)

    if block_m is None:
        block_m = _pick_block_m(tk, c_pad, vmem_limit)
    # 256-aligned M tiles (full MXU passes / unmasked stores on v6e/v7x), at
    # least 2 tiles when possible so both v7x TensorCores get parallel work.
    nm, tm, m_pad = _tile_plan(m, block_m, 256, min_tiles=2)

    if m_pad != m or k_pad != k:
        patches = jnp.pad(patches, ((0, m_pad - m), (0, k_pad - k)))
    if k_pad != k or c_pad != cout:
        w_flat = jnp.pad(w_flat, ((0, k_pad - k), (0, c_pad - cout)))

    # Pass 1: tiled GEMM (f32 VMEM accumulator, bf16 output) + per-tile BN partials.
    y, ssum, ssq = conv_gemm_stats_pallas(patches, w_flat, tm=tm, tk=tk,
                                          vmem_limit=vmem_limit)

    # Fold partials (zero-padded rows contribute zero) into batch statistics.
    sum_c = jnp.sum(ssum[:, 0, :], axis=0)
    sq_c = jnp.sum(ssq[:, 0, :], axis=0)
    gamma = jnp.pad(params["gamma"].astype(jnp.float32), (0, c_pad - cout))
    beta = jnp.pad(params["beta"].astype(jnp.float32), (0, c_pad - cout))
    scale, shift = bn_scale_shift(sum_c, sq_c, m, gamma, beta)

    if fused_epilogue:
        # jnp epilogue: consumed only by the next layer's im2col, so XLA fuses the
        # mul/add/max into that gather instead of another full HBM round trip.
        act = jnp.maximum(
            y[:m, :cout].astype(jnp.float32) * scale[:cout] + shift[:cout],
            0.0).astype(out_dtype)
        return act.reshape(n, h, w, cout)

    # Pass 2: normalize + affine + ReLU, lane-dense output (final layer).
    out = bn_relu_pallas(y, scale.reshape(1, c_pad), shift.reshape(1, c_pad),
                         tm=tm, out_dtype=out_dtype, vmem_limit=vmem_limit)
    return out[:m, :cout].reshape(n, h, w, cout)


# ---------------------------------------------------------------------------
# Up module forward (NCHW in / NCHW out, NHWC internally)
# ---------------------------------------------------------------------------
def up_forward(x1_nchw, x2_nchw, params, *, block_m=None, block_k=2048):
    x1 = jnp.transpose(x1_nchw, (0, 2, 3, 1))
    x2 = jnp.transpose(x2_nchw, (0, 2, 3, 1))
    x1 = upsample_bilinear_x2_align_corners(x1)
    x1 = pad_like_torch(x1, x2)
    x = jnp.concatenate([x2, x1], axis=-1)       # torch.cat([x2, x1], dim=1)
    # conv1: Pallas GEMM+stats; BN+ReLU fused (lazily, in jnp) into conv2's im2col.
    # The intermediate activation stays bf16 (only consumed by bf16 im2col).
    x = conv_bn_relu(x, params["conv1"], out_dtype=jnp.bfloat16,
                     fused_epilogue=True, block_m=block_m, block_k=block_k)
    # conv2: Pallas GEMM+stats, then the lane-dense Pallas BN+ReLU epilogue.
    x = conv_bn_relu(x, params["conv2"], out_dtype=jnp.float32,
                     fused_epilogue=False, block_m=block_m, block_k=block_k)
    return jnp.transpose(x, (0, 3, 1, 2))


# ---------------------------------------------------------------------------
# Pure-JAX reference (replicates the bf16-operand / bf16-intermediate numerics)
# ---------------------------------------------------------------------------
def _conv_bn_relu_ref(x_nhwc, params, out_dtype):
    n, h, w, _ = x_nhwc.shape
    cout = params["w"].shape[0]
    patches = im2col_3x3_nhwc(x_nhwc)
    w_flat = flatten_conv_weight(params["w"])
    y = jnp.dot(patches, w_flat, preferred_element_type=jnp.float32)
    scale, shift = bn_scale_shift(jnp.sum(y, axis=0), jnp.sum(y * y, axis=0),
                                  y.shape[0],
                                  params["gamma"].astype(jnp.float32),
                                  params["beta"].astype(jnp.float32))
    y16 = y.astype(jnp.bfloat16)     # pass 1 emits bf16 pre-BN activations
    out = jnp.maximum(y16.astype(jnp.float32) * scale[None, :] + shift[None, :],
                      0.0).astype(out_dtype)
    return out.reshape(n, h, w, cout)


def up_forward_ref(x1_nchw, x2_nchw, params):
    x1 = jnp.transpose(x1_nchw, (0, 2, 3, 1))
    x2 = jnp.transpose(x2_nchw, (0, 2, 3, 1))
    x1 = upsample_bilinear_x2_align_corners(x1)
    x1 = pad_like_torch(x1, x2)
    x = jnp.concatenate([x2, x1], axis=-1)
    x = _conv_bn_relu_ref(x, params["conv1"], jnp.bfloat16)
    x = _conv_bn_relu_ref(x, params["conv2"], jnp.float32)
    return jnp.transpose(x, (0, 3, 1, 2))


def init_params(key, in_channels, out_channels):
    k = jax.random.split(key, 4)

    def layer(kw, kb, cin, cout):
        return {
            "w": jax.random.normal(kw, (cout, cin, 3, 3), jnp.float32) * 0.1,
            # Present for nn.Conv2d interface fidelity; a no-op under training-mode BN.
            "b": jax.random.normal(kb, (cout,), jnp.float32) * 0.05,
            "gamma": jnp.ones((cout,), jnp.float32),
            "beta": jnp.zeros((cout,), jnp.float32),
        }

    return {
        "conv1": layer(k[0], k[1], in_channels, out_channels),
        "conv2": layer(k[2], k[3], out_channels, out_channels),
    }


if __name__ == "__main__":
    key = jax.random.PRNGKey(0)
    k1, k2, kp = jax.random.split(key, 3)

    # x1: low-res features to be upsampled; x2: skip connection (NCHW, PyTorch layout)
    x1 = jax.random.normal(k1, (2, 4, 8, 8), jnp.float32)
    x2 = jax.random.normal(k2, (2, 4, 16, 16), jnp.float32)

    in_channels = x1.shape[1] + x2.shape[1]      # channels after concat = 8
    out_channels = 4
    params = init_params(kp, in_channels, out_channels)

    # Auto tile planning: M = 2*16*16 = 512 -> two 256-row tiles, which exercises
    # the multi-tile partial-statistics fold and the megacore-parallel M axis.
    fwd = jax.jit(up_forward)

    out = jax.block_until_ready(fwd(x1, x2, params))
    ref = jax.block_until_ready(up_forward_ref(x1, x2, params))

    assert out.shape == (2, out_channels, 16, 16), out.shape
    # bf16 MXU operands + bf16 pre-BN intermediates -> bf16-level tolerance.
    assert jnp.allclose(out, ref, atol=5e-3, rtol=1e-2), "mismatch vs reference"
    print("KERNEL_OK")
</pallas_src>

<mosaic_0001>
module attributes {stable_mosaic.version = 11 : i64} {
  func.func @_conv_gemm_stats_kernel(%arg0: i32, %arg1: i32, %arg2: memref<256x72xbf16, #tpu.memory_space<vmem>>, %arg3: memref<72x128xbf16, #tpu.memory_space<vmem>>, %arg4: memref<256x128xbf16, #tpu.memory_space<vmem>>, %arg5: memref<1x1x128xf32, #tpu.memory_space<vmem>>, %arg6: memref<1x1x128xf32, #tpu.memory_space<vmem>>, %arg7: memref<256x128xf32, #tpu.memory_space<vmem>>) attributes {dimension_semantics = [#tpu.dimension_semantics<parallel>, #tpu.dimension_semantics<arbitrary>], iteration_bounds = array<i64: 2, 1>, scalar_prefetch = 0 : i64, scratch_operands = 1 : i64, tpu.core_type = #tpu.core_type<tc>, window_params = [{transform_indices = @transform_0, window_bounds = array<i64: 256, 72>}, {transform_indices = @transform_1, window_bounds = array<i64: 72, 128>}, {transform_indices = @transform_2, window_bounds = array<i64: 256, 128>}, {transform_indices = @transform_3, window_bounds = array<i64: 1, 1, 128>}, {transform_indices = @transform_4, window_bounds = array<i64: 1, 1, 128>}]} {
    %c0_i32 = arith.constant 0 : i32
    %0 = arith.cmpi eq, %arg1, %c0_i32 : i32
    %1 = arith.extui %0 : i1 to i32
    %c0_i32_0 = arith.constant 0 : i32
    %2 = arith.cmpi ne, %1, %c0_i32_0 : i32
    scf.if %2 {
      %cst_10 = arith.constant 0.000000e+00 : f32
      %12 = vector.broadcast %cst_10 : f32 to vector<256x128xf32>
      %c0_11 = arith.constant 0 : index
      %c0_12 = arith.constant 0 : index
      %13 = vector.load %arg7[%c0_11, %c0_12] : memref<256x128xf32, #tpu.memory_space<vmem>>, vector<256x128xf32>
      tpu.vector_store %arg7[%c0_11, %c0_12], %12 {strides = array<i32>} : memref<256x128xf32, #tpu.memory_space<vmem>>, vector<256x128xf32>,
    } else {
    }
    %c0 = arith.constant 0 : index
    %c0_1 = arith.constant 0 : index
    %3 = vector.load %arg7[%c0, %c0_1] : memref<256x128xf32, #tpu.memory_space<vmem>>, vector<256x128xf32>
    %c0_2 = arith.constant 0 : index
    %c0_3 = arith.constant 0 : index
    %4 = vector.load %arg2[%c0_2, %c0_3] : memref<256x72xbf16, #tpu.memory_space<vmem>>, vector<256x72xbf16>
    %c0_4 = arith.constant 0 : index
    %c0_5 = arith.constant 0 : index
    %5 = vector.load %arg3[%c0_4, %c0_5] : memref<72x128xbf16, #tpu.memory_space<vmem>>, vector<72x128xbf16>
    %cst = arith.constant dense<0.000000e+00> : vector<256x128xf32>
    %6 = tpu.matmul %4, %5, %cst {dimension_numbers = #tpu.dot_dimension_numbers<[1], [0], [0], [1], [0, 0, 1, 1], [], []>} : vector<256x72xbf16>, vector<72x128xbf16>, vector<256x128xf32> -> vector<256x128xf32>
    %7 = arith.addf %3, %6 : vector<256x128xf32>
    %c0_6 = arith.constant 0 : index
    %c0_7 = arith.constant 0 : index
    %8 = vector.load %arg7[%c0_6, %c0_7] : memref<256x128xf32, #tpu.memory_space<vmem>>, vector<256x128xf32>
    tpu.vector_store %arg7[%c0_6, %c0_7], %7 {strides = array<i32>} : memref<256x128xf32, #tpu.memory_space<vmem>>, vector<256x128xf32>,
    %c0_i32_8 = arith.constant 0 : i32
    %9 = arith.cmpi eq, %arg1, %c0_i32_8 : i32
    %10 = arith.extui %9 : i1 to i32
    %c0_i32_9 = arith.constant 0 : i32
    %11 = arith.cmpi ne, %10, %c0_i32_9 : i32
    scf.if %11 {
      %c0_10 = arith.constant 0 : index
      %c0_11 = arith.constant 0 : index
      %12 = vector.load %arg7[%c0_10, %c0_11] : memref<256x128xf32, #tpu.memory_space<vmem>>, vector<256x128xf32>
      %13 = arith.truncf %12 : vector<256x128xf32> to vector<256x128xbf16>
      %c0_12 = arith.constant 0 : index
      %c0_13 = arith.constant 0 : index
      %14 = vector.load %arg4[%c0_12, %c0_13] : memref<256x128xbf16, #tpu.memory_space<vmem>>, vector<256x128xbf16>
      tpu.vector_store %arg4[%c0_12, %c0_13], %13 {strides = array<i32>} : memref<256x128xbf16, #tpu.memory_space<vmem>>, vector<256x128xbf16>,
      %cst_14 = arith.constant dense<0.000000e+00> : vector<128xf32>
      %15 = vector.multi_reduction <add>, %12, %cst_14 [0] : vector<256x128xf32> to vector<128xf32>
      %16 = vector.shape_cast %15 : vector<128xf32> to vector<1x128xf32>
      %17 = vector.shape_cast %16 : vector<1x128xf32> to vector<1x1x128xf32>
      %c0_15 = arith.constant 0 : index
      %c0_16 = arith.constant 0 : index
      %c0_17 = arith.constant 0 : index
      %18 = vector.load %arg5[%c0_15, %c0_16, %c0_17] : memref<1x1x128xf32, #tpu.memory_space<vmem>>, vector<1x1x128xf32>
      tpu.vector_store %arg5[%c0_15, %c0_16, %c0_17], %17 {strides = array<i32>} : memref<1x1x128xf32, #tpu.memory_space<vmem>>, vector<1x1x128xf32>,
      %19 = arith.mulf %12, %12 : vector<256x128xf32>
      %cst_18 = arith.constant dense<0.000000e+00> : vector<128xf32>
      %20 = vector.multi_reduction <add>, %19, %cst_18 [0] : vector<256x128xf32> to vector<128xf32>
      %21 = vector.shape_cast %20 : vector<128xf32> to vector<1x128xf32>
      %22 = vector.shape_cast %21 : vector<1x128xf32> to vector<1x1x128xf32>
      %c0_19 = arith.constant 0 : index
      %c0_20 = arith.constant 0 : index
      %c0_21 = arith.constant 0 : index
      %23 = vector.load %arg6[%c0_19, %c0_20, %c0_21] : memref<1x1x128xf32, #tpu.memory_space<vmem>>, vector<1x1x128xf32>
      tpu.vector_store %arg6[%c0_19, %c0_20, %c0_21], %22 {strides = array<i32>} : memref<1x1x128xf32, #tpu.memory_space<vmem>>, vector<1x1x128xf32>,
    } else {
    }
    return
  }
  func.func @transform_0(%arg0: i32, %arg1: i32) -> (i32, i32) {
    %c0_i32 = arith.constant 0 : i32
    return %arg0, %arg1 : i32, i32
  }
  func.func @transform_1(%arg0: i32, %arg1: i32) -> (i32, i32) {
    %c0_i32 = arith.constant 0 : i32
    %c0_i32_0 = arith.constant 0 : i32
    return %arg1, %c0_i32 : i32, i32
  }
  func.func @transform_2(%arg0: i32, %arg1: i32) -> (i32, i32) {
    %c0_i32 = arith.constant 0 : i32
    %c0_i32_0 = arith.constant 0 : i32
    return %arg0, %c0_i32 : i32, i32
  }
  func.func @transform_3(%arg0: i32, %arg1: i32) -> (i32, i32, i32) {
    %c0_i32 = arith.constant 0 : i32
    %c0_i32_0 = arith.constant 0 : i32
    %c0_i32_1 = arith.constant 0 : i32
    return %arg0, %c0_i32, %c0_i32_0 : i32, i32, i32
  }
  func.func @transform_4(%arg0: i32, %arg1: i32) -> (i32, i32, i32) {
    %c0_i32 = arith.constant 0 : i32
    %c0_i32_0 = arith.constant 0 : i32
    %c0_i32_1 = arith.constant 0 : i32
    return %arg0, %c0_i32, %c0_i32_0 : i32, i32, i32
  }
}

module attributes {stable_mosaic.version = 11 : i64} {
  func.func @_conv_gemm_stats_kernel(%arg0: i32, %arg1: i32, %arg2: memref<256x36xbf16, #tpu.memory_space<vmem>>, %arg3: memref<36x128xbf16, #tpu.memory_space<vmem>>, %arg4: memref<256x128xbf16, #tpu.memory_space<vmem>>, %arg5: memref<1x1x128xf32, #tpu.memory_space<vmem>>, %arg6: memref<1x1x128xf32, #tpu.memory_space<vmem>>, %arg7: memref<256x128xf32, #tpu.memory_space<vmem>>) attributes {dimension_semantics = [#tpu.dimension_semantics<parallel>, #tpu.dimension_semantics<arbitrary>], iteration_bounds = array<i64: 2, 1>, scalar_prefetch = 0 : i64, scratch_operands = 1 : i64, tpu.core_type = #tpu.core_type<tc>, window_params = [{transform_indices = @transform_0, window_bounds = array<i64: 256, 36>}, {transform_indices = @transform_1, window_bounds = array<i64: 36, 128>}, {transform_indices = @transform_2, window_bounds = array<i64: 256, 128>}, {transform_indices = @transform_3, window_bounds = array<i64: 1, 1, 128>}, {transform_indices = @transform_4, window_bounds = array<i64: 1, 1, 128>}]} {
    %c0_i32 = arith.constant 0 : i32
    %0 = arith.cmpi eq, %arg1, %c0_i32 : i32
    %1 = arith.extui %0 : i1 to i32
    %c0_i32_0 = arith.constant 0 : i32
    %2 = arith.cmpi ne, %1, %c0_i32_0 : i32
    scf.if %2 {
      %cst_10 = arith.constant 0.000000e+00 : f32
      %12 = vector.broadcast %cst_10 : f32 to vector<256x128xf32>
      %c0_11 = arith.constant 0 : index
      %c0_12 = arith.constant 0 : index
      %13 = vector.load %arg7[%c0_11, %c0_12] : memref<256x128xf32, #tpu.memory_space<vmem>>, vector<256x128xf32>
      tpu.vector_store %arg7[%c0_11, %c0_12], %12 {strides = array<i32>} : memref<256x128xf32, #tpu.memory_space<vmem>>, vector<256x128xf32>,
    } else {
    }
    %c0 = arith.constant 0 : index
    %c0_1 = arith.constant 0 : index
    %3 = vector.load %arg7[%c0, %c0_1] : memref<256x128xf32, #tpu.memory_space<vmem>>, vector<256x128xf32>
    %c0_2 = arith.constant 0 : index
    %c0_3 = arith.constant 0 : index
    %4 = vector.load %arg2[%c0_2, %c0_3] : memref<256x36xbf16, #tpu.memory_space<vmem>>, vector<256x36xbf16>
    %c0_4 = arith.constant 0 : index
    %c0_5 = arith.constant 0 : index
    %5 = vector.load %arg3[%c0_4, %c0_5] : memref<36x128xbf16, #tpu.memory_space<vmem>>, vector<36x128xbf16>
    %cst = arith.constant dense<0.000000e+00> : vector<256x128xf32>
    %6 = tpu.matmul %4, %5, %cst {dimension_numbers = #tpu.dot_dimension_numbers<[1], [0], [0], [1], [0, 0, 1, 1], [], []>} : vector<256x36xbf16>, vector<36x128xbf16>, vector<256x128xf32> -> vector<256x128xf32>
    %7 = arith.addf %3, %6 : vector<256x128xf32>
    %c0_6 = arith.constant 0 : index
    %c0_7 = arith.constant 0 : index
    %8 = vector.load %arg7[%c0_6, %c0_7] : memref<256x128xf32, #tpu.memory_space<vmem>>, vector<256x128xf32>
    tpu.vector_store %arg7[%c0_6, %c0_7], %7 {strides = array<i32>} : memref<256x128xf32, #tpu.memory_space<vmem>>, vector<256x128xf32>,
    %c0_i32_8 = arith.constant 0 : i32
    %9 = arith.cmpi eq, %arg1, %c0_i32_8 : i32
    %10 = arith.extui %9 : i1 to i32
    %c0_i32_9 = arith.constant 0 : i32
    %11 = arith.cmpi ne, %10, %c0_i32_9 : i32
    scf.if %11 {
      %c0_10 = arith.constant 0 : index
      %c0_11 = arith.constant 0 : index
      %12 = vector.load %arg7[%c0_10, %c0_11] : memref<256x128xf32, #tpu.memory_space<vmem>>, vector<256x128xf32>
      %13 = arith.truncf %12 : vector<256x128xf32> to vector<256x128xbf16>
      %c0_12 = arith.constant 0 : index
      %c0_13 = arith.constant 0 : index
      %14 = vector.load %arg4[%c0_12, %c0_13] : memref<256x128xbf16, #tpu.memory_space<vmem>>, vector<256x128xbf16>
      tpu.vector_store %arg4[%c0_12, %c0_13], %13 {strides = array<i32>} : memref<256x128xbf16, #tpu.memory_space<vmem>>, vector<256x128xbf16>,
      %cst_14 = arith.constant dense<0.000000e+00> : vector<128xf32>
      %15 = vector.multi_reduction <add>, %12, %cst_14 [0] : vector<256x128xf32> to vector<128xf32>
      %16 = vector.shape_cast %15 : vector<128xf32> to vector<1x128xf32>
      %17 = vector.shape_cast %16 : vector<1x128xf32> to vector<1x1x128xf32>
      %c0_15 = arith.constant 0 : index
      %c0_16 = arith.constant 0 : index
      %c0_17 = arith.constant 0 : index
      %18 = vector.load %arg5[%c0_15, %c0_16, %c0_17] : memref<1x1x128xf32, #tpu.memory_space<vmem>>, vector<1x1x128xf32>
      tpu.vector_store %arg5[%c0_15, %c0_16, %c0_17], %17 {strides = array<i32>} : memref<1x1x128xf32, #tpu.memory_space<vmem>>, vector<1x1x128xf32>,
      %19 = arith.mulf %12, %12 : vector<256x128xf32>
      %cst_18 = arith.constant dense<0.000000e+00> : vector<128xf32>
      %20 = vector.multi_reduction <add>, %19, %cst_18 [0] : vector<256x128xf32> to vector<128xf32>
      %21 = vector.shape_cast %20 : vector<128xf32> to vector<1x128xf32>
      %22 = vector.shape_cast %21 : vector<1x128xf32> to vector<1x1x128xf32>
      %c0_19 = arith.constant 0 : index
      %c0_20 = arith.constant 0 : index
      %c0_21 = arith.constant 0 : index
      %23 = vector.load %arg6[%c0_19, %c0_20, %c0_21] : memref<1x1x128xf32, #tpu.memory_space<vmem>>, vector<1x1x128xf32>
      tpu.vector_store %arg6[%c0_19, %c0_20, %c0_21], %22 {strides = array<i32>} : memref<1x1x128xf32, #tpu.memory_space<vmem>>, vector<1x1x128xf32>,
    } else {
    }
    return
  }
  func.func @transform_0(%arg0: i32, %arg1: i32) -> (i32, i32) {
    %c0_i32 = arith.constant 0 : i32
    return %arg0, %arg1 : i32, i32
  }
  func.func @transform_1(%arg0: i32, %arg1: i32) -> (i32, i32) {
    %c0_i32 = arith.constant 0 : i32
    %c0_i32_0 = arith.constant 0 : i32
    return %arg1, %c0_i32 : i32, i32
  }
  func.func @transform_2(%arg0: i32, %arg1: i32) -> (i32, i32) {
    %c0_i32 = arith.constant 0 : i32
    %c0_i32_0 = arith.constant 0 : i32
    return %arg0, %c0_i32 : i32, i32
  }
  func.func @transform_3(%arg0: i32, %arg1: i32) -> (i32, i32, i32) {
    %c0_i32 = arith.constant 0 : i32
    %c0_i32_0 = arith.constant 0 : i32
    %c0_i32_1 = arith.constant 0 : i32
    return %arg0, %c0_i32, %c0_i32_0 : i32, i32, i32
  }
  func.func @transform_4(%arg0: i32, %arg1: i32) -> (i32, i32, i32) {
    %c0_i32 = arith.constant 0 : i32
    %c0_i32_0 = arith.constant 0 : i32
    %c0_i32_1 = arith.constant 0 : i32
    return %arg0, %c0_i32, %c0_i32_0 : i32, i32, i32
  }
}

module attributes {stable_mosaic.version = 11 : i64} {
  func.func @_bn_relu_kernel(%arg0: i32, %arg1: memref<256x128xbf16, #tpu.memory_space<vmem>>, %arg2: memref<1x128xf32, #tpu.memory_space<vmem>>, %arg3: memref<1x128xf32, #tpu.memory_space<vmem>>, %arg4: memref<256x128xf32, #tpu.memory_space<vmem>>) attributes {dimension_semantics = [#tpu.dimension_semantics<parallel>], iteration_bounds = array<i64: 2>, scalar_prefetch = 0 : i64, scratch_operands = 0 : i64, tpu.core_type = #tpu.core_type<tc>, window_params = [{transform_indices = @transform_0, window_bounds = array<i64: 256, 128>}, {pipeline_mode = #tpu.pipeline_mode<synchronous>, transform_indices = @transform_1, window_bounds = array<i64: 1, 128>}, {pipeline_mode = #tpu.pipeline_mode<synchronous>, transform_indices = @transform_2, window_bounds = array<i64: 1, 128>}, {transform_indices = @transform_3, window_bounds = array<i64: 256, 128>}]} {
    %c0 = arith.constant 0 : index
    %c0_0 = arith.constant 0 : index
    %0 = vector.load %arg1[%c0, %c0_0] : memref<256x128xbf16, #tpu.memory_space<vmem>>, vector<256x128xbf16>
    %1 = arith.extf %0 : vector<256x128xbf16> to vector<256x128xf32>
    %c0_1 = arith.constant 0 : index
    %c0_2 = arith.constant 0 : index
    %2 = vector.load %arg2[%c0_1, %c0_2] : memref<1x128xf32, #tpu.memory_space<vmem>>, vector<1x128xf32>
    %3 = vector.broadcast %2 : vector<1x128xf32> to vector<256x128xf32>
    %4 = arith.mulf %1, %3 : vector<256x128xf32>
    %c0_3 = arith.constant 0 : index
    %c0_4 = arith.constant 0 : index
    %5 = vector.load %arg3[%c0_3, %c0_4] : memref<1x128xf32, #tpu.memory_space<vmem>>, vector<1x128xf32>
    %6 = vector.broadcast %5 : vector<1x128xf32> to vector<256x128xf32>
    %7 = arith.addf %4, %6 : vector<256x128xf32>
    %cst = arith.constant 0.000000e+00 : f32
    %8 = vector.broadcast %cst : f32 to vector<256x128xf32>
    %9 = arith.maximumf %7, %8 : vector<256x128xf32>
    %c0_5 = arith.constant 0 : index
    %c0_6 = arith.constant 0 : index
    %10 = vector.load %arg4[%c0_5, %c0_6] : memref<256x128xf32, #tpu.memory_space<vmem>>, vector<256x128xf32>
    tpu.vector_store %arg4[%c0_5, %c0_6], %9 {strides = array<i32>} : memref<256x128xf32, #tpu.memory_space<vmem>>, vector<256x128xf32>,
    return
  }
  func.func @transform_0(%arg0: i32) -> (i32, i32) {
    %c0_i32 = arith.constant 0 : i32
    %c0_i32_0 = arith.constant 0 : i32
    return %arg0, %c0_i32 : i32, i32
  }
  func.func @transform_1(%arg0: i32) -> (i32, i32) {
    %c0_i32 = arith.constant 0 : i32
    %c0_i32_0 = arith.constant 0 : i32
    %c0_i32_1 = arith.constant 0 : i32
    return %c0_i32, %c0_i32_0 : i32, i32
  }
  func.func @transform_2(%arg0: i32) -> (i32, i32) {
    %c0_i32 = arith.constant 0 : i32
    %c0_i32_0 = arith.constant 0 : i32
    %c0_i32_1 = arith.constant 0 : i32
    return %c0_i32, %c0_i32_0 : i32, i32
  }
  func.func @transform_3(%arg0: i32) -> (i32, i32) {
    %c0_i32 = arith.constant 0 : i32
    %c0_i32_0 = arith.constant 0 : i32
    return %arg0, %c0_i32 : i32, i32
  }
}

</mosaic_0001>

<llo_original>
// kernel: up_forward.3
$region0: #{up_forward.3}
  #allocation0 [shape = 'u32[]', space=smem, size = 0x4, offset = 0x4, fixed_abs, tag = 'smem constant byte address 0x4 - core index']
  #allocation1 [shape = 'u32[144,128]{1,0:T(1,128)}', space=vmem, size = 0x12000, scoped, tag = 'internal scratch']
  #allocation2 [shape = 'f32[256,128]{1,0:T(8,128)}', space=vmem, size = 0x20000, scoped, tag = 'scratch operand']
  %s0 = inlined_call_operand.vmem [shape: bf16[512,72], index: 0, kind: input, shape index: {}]
  %s1 = inlined_call_operand.vmem [shape: bf16[72,128], index: 1, kind: input, shape index: {}]
  %s2 = inlined_call_operand.vmem [shape: bf16[512,128], index: 2, kind: output, shape index: {0}]
  %s3 = inlined_call_operand.vmem [shape: f32[2,1,128], index: 3, kind: output, shape index: {1}]
  %s4 = inlined_call_operand.vmem [shape: f32[2,1,128], index: 4, kind: output, shape index: {2}]
  %5 = xla_tuple %s2, %s3, %s4
  %s6 = sld [smem:[#allocation0]]
  $region65: #{up_forward.3} parent=0
    _
  %s8 = ssub.s32 1, %s6
  %s9 = scalar_select 0, %s8, %s6
  loop: start=0, step=1, limit=4
  $region2: #{up_forward.3} parent=0 // loop_pre_header
    _
  $region3: #{up_forward.3} parent=0 // loop_header
    %s11 = sphi 0, %s15
    %p12 = scmp.ge.s32.totalorder %s11, 4
    %s18 = sphi 0, %s30
    %s19 = sphi 0, %s26
    %s20 = sphi 0, %s18
    %s21 = sphi 0, %s19
    %s22 = sphi 0, %s20
    %s23 = sphi 0, %s21
    %s35 = sphi 0, %s37
    %s38 = sphi 0, %s35
    %s39 = sphi 0, %s38
    %s55 = sphi 0, %s39
    %s61 = sphi 0, %s63
    %s64 = sphi 0, %s61
    %s65 = sphi 0, %s64
    %s81 = sphi 0, %s65
    %s87 = sphi 0, %s89
    %s90 = sphi 0, %s87
    %s91 = sphi 0, %s90
    %s107 = sphi 0, %s91
    %s113 = sphi 0, %s115
    %s116 = sphi 0, %s113
    %s117 = sphi 0, %s116
    %s133 = sphi 0, %s117
    %s139 = sphi 0, %s141
    %s142 = sphi 0, %s139
    %s143 = sphi 0, %s142
    %s159 = sphi 0, %s143
  $region4: #{up_forward.3} parent=0 // loop_header_branch
    %14 = sbr.rel (%p12) target = $region8
  $region5: #{up_forward.3} parent=0 // loop_body
    %s16 = ssub.s32 %s11, 1
    %s17 = ssub.s32 %s11, 2
    %s24 = sadd.s32 1, %s19
    %p25 = scmp.ge.s32.totalorder %s24, 1
    %s26 = scalar_select %p25, 0, %s24
    %s27 = sadd.s32 1, %s18
    %s28 = scalar_select %p25, %s27, %s18
    %p29 = scmp.ge.s32.totalorder %s28, 2
    %s30 = scalar_select %p29, 0, %s28
    %s31 = ssub.s32 %s18, %s30
    %s32 = ssub.s32 %s19, %s26
    %s33 = sor.u32 %s31, %s32
    %p34 = scmp.eq.s32.totalorder %s33, 0
    %s36 = sadd.s32 %s35, 1
    %s37 = scalar_select %p34, %s35, %s36
    %p40 = pneg %p34
    %p41 = scmp.eq.s32.totalorder %s11, 1
    %p42 = por %p40, %p41
    %p43 = scmp.ne.s32.totalorder %s35, %s38
    %p44 = scmp.eq.s32.totalorder %s11, 0
    %p45 = por %p43, %p44
    %p46 = scmp.ne.s32.totalorder %s35, %s38
    %p47 = scmp.eq.s32.totalorder %s16, 1
    %p48 = por %p46, %p47
    %p49 = scmp.ne.s32.totalorder %s38, %s39
    %p50 = scmp.eq.s32.totalorder %s16, 0
    %p51 = por %p49, %p50
    %p52 = scmp.ne.s32.totalorder %s38, %s39
    %p53 = scmp.eq.s32.totalorder %s17, 1
    %p54 = por %p52, %p53
    %p56 = scmp.ne.s32.totalorder %s39, %s55
    %p57 = scmp.eq.s32.totalorder %s17, 0
    %p58 = por %p56, %p57
    %s59 = ssub.s32 %s19, %s26
    %p60 = scmp.eq.s32.totalorder %s59, 0
    %s62 = sadd.s32 %s61, 1
    %s63 = scalar_select %p60, %s61, %s62
    %p66 = pneg %p60
    %p67 = scmp.eq.s32.totalorder %s11, 1
    %p68 = por %p66, %p67
    %p69 = scmp.ne.s32.totalorder %s61, %s64
    %p70 = scmp.eq.s32.totalorder %s11, 0
    %p71 = por %p69, %p70
    %p72 = scmp.ne.s32.totalorder %s61, %s64
    %p73 = scmp.eq.s32.totalorder %s16, 1
    %p74 = por %p72, %p73
    %p75 = scmp.ne.s32.totalorder %s64, %s65
    %p76 = scmp.eq.s32.totalorder %s16, 0
    %p77 = por %p75, %p76
    %p78 = scmp.ne.s32.totalorder %s64, %s65
    %p79 = scmp.eq.s32.totalorder %s17, 1
    %p80 = por %p78, %p79
    %p82 = scmp.ne.s32.totalorder %s65, %s81
    %p83 = scmp.eq.s32.totalorder %s17, 0
    %p84 = por %p82, %p83
    %s85 = ssub.s32 %s18, %s30
    %p86 = scmp.eq.s32.totalorder %s85, 0
    %s88 = sadd.s32 %s87, 1
    %s89 = scalar_select %p86, %s87, %s88
    %p92 = pneg %p86
    %p93 = scmp.eq.s32.totalorder %s11, 1
    %p94 = por %p92, %p93
    %p95 = scmp.ne.s32.totalorder %s87, %s90
    %p96 = scmp.eq.s32.totalorder %s11, 0
    %p97 = por %p95, %p96
    %p98 = scmp.ne.s32.totalorder %s87, %s90
    %p99 = scmp.eq.s32.totalorder %s16, 1
    %p100 = por %p98, %p99
    %p101 = scmp.ne.s32.totalorder %s90, %s91
    %p102 = scmp.eq.s32.totalorder %s16, 0
    %p103 = por %p101, %p102
    %p104 = scmp.ne.s32.totalorder %s90, %s91
    %p105 = scmp.eq.s32.totalorder %s17, 1
    %p106 = por %p104, %p105
    %p108 = scmp.ne.s32.totalorder %s91, %s107
    %p109 = scmp.eq.s32.totalorder %s17, 0
    %p110 = por %p108, %p109
    %s111 = ssub.s32 %s18, %s30
    %p112 = scmp.eq.s32.totalorder %s111, 0
    %s114 = sadd.s32 %s113, 1
    %s115 = scalar_select %p112, %s113, %s114
    %p118 = pneg %p112
    %p119 = scmp.eq.s32.totalorder %s11, 1
    %p120 = por %p118, %p119
    %p121 = scmp.ne.s32.totalorder %s113, %s116
    %p122 = scmp.eq.s32.totalorder %s11, 0
    %p123 = por %p121, %p122
    %p124 = scmp.ne.s32.totalorder %s113, %s116
    %p125 = scmp.eq.s32.totalorder %s16, 1
    %p126 = por %p124, %p125
    %p127 = scmp.ne.s32.totalorder %s116, %s117
    %p128 = scmp.eq.s32.totalorder %s16, 0
    %p129 = por %p127, %p128
    %p130 = scmp.ne.s32.totalorder %s116, %s117
    %p131 = scmp.eq.s32.totalorder %s17, 1
    %p132 = por %p130, %p131
    %p134 = scmp.ne.s32.totalorder %s117, %s133
    %p135 = scmp.eq.s32.totalorder %s17, 0
    %p136 = por %p134, %p135
    %s137 = ssub.s32 %s18, %s30
    %p138 = scmp.eq.s32.totalorder %s137, 0
    %s140 = sadd.s32 %s139, 1
    %s141 = scalar_select %p138, %s139, %s140
    %p144 = pneg %p138
    %p145 = scmp.eq.s32.totalorder %s11, 1
    %p146 = por %p144, %p145
    %p147 = scmp.ne.s32.totalorder %s139, %s142
    %p148 = scmp.eq.s32.totalorder %s11, 0
    %p149 = por %p147, %p148
    %p150 = scmp.ne.s32.totalorder %s139, %s142
    %p151 = scmp.eq.s32.totalorder %s16, 1
    %p152 = por %p150, %p151
    %p153 = scmp.ne.s32.totalorder %s142, %s143
    %p154 = scmp.eq.s32.totalorder %s16, 0
    %p155 = por %p153, %p154
    %p156 = scmp.ne.s32.totalorder %s142, %s143
    %p157 = scmp.eq.s32.totalorder %s17, 1
    %p158 = por %p156, %p157
    %p160 = scmp.ne.s32.totalorder %s143, %s159
    %p161 = scmp.eq.s32.totalorder %s17, 0
    %p162 = por %p160, %p161
    %p163 = scmp.le.s32.totalorder 1, %s11
    %p164 = scmp.lt.s32.totalorder %s11, 3
    %p165 = pnand %p163, %p164
    %p166 = pneg %p165
    // Predicated region
    $region9: #{up_forward.3} parent=5 // pred_check
      _
    $region10: #{up_forward.3} parent=5 // pred_check_branch
      %168 = sbr.rel (%p165) target = $region12
    $region11: #{up_forward.3} parent=5 // pred_region
      %s169 = ssub.s32 %s11, 1
      // Predicated region
      $region13: #{up_forward.3} parent=11 // pred_check
        %p170 = pneg %p77
      $region14: #{up_forward.3} parent=11 // pred_check_branch
        %172 = sbr.rel (%p170) target = $region16
      $region15: #{up_forward.3} parent=11 // pred_region
        %s173 = smul.u32 9, %s21
        %p174 = scmp.lt.s32.totalorder %s173, 8
        %s175 = scalar_select %p174, %s173, 8
        %s176 = smul.addr %s175, 4
        %s177 = scalar_lea.vmem %s1, %s176
        %s178 = smul.u32 9, %s21
      $region16: #{up_forward.3} parent=11 // pred_fallthru
        _
    $region12: #{up_forward.3} parent=5 // pred_fallthru
      _
    %p179 = scmp.lt.s32.totalorder %s11, 2
    // Predicated region
    $region17: #{up_forward.3} parent=5 // pred_check
      %p180 = pneg %p179
    $region18: #{up_forward.3} parent=5 // pred_check_branch
      %182 = sbr.rel (%p180) target = $region20
    $region19: #{up_forward.3} parent=5 // pred_region
      // Predicated region
      $region21: #{up_forward.3} parent=19 // pred_check
        %p183 = pneg %p45
      $region22: #{up_forward.3} parent=19 // pred_check_branch
        %185 = sbr.rel (%p183) target = $region24
      $region23: #{up_forward.3} parent=19 // pred_region
        %s186 = smul.u32 32, %s18
        %p187 = scmp.lt.s32.totalorder %s186, 63
        %s188 = scalar_select %p187, %s186, 63
        %p189 = scmp.lt.s32.totalorder %s19, 0
        %s190 = scalar_select %p189, %s19, 0
        %s191 = sadd.s32 %s190, %s188
        %s192 = smul.addr %s191, 4
        %s193 = scalar_lea.vmem %s0, %s192
        %s194 = smul.u32 32, %s18
      $region24: #{up_forward.3} parent=19 // pred_fallthru
        _
    $region20: #{up_forward.3} parent=5 // pred_fallthru
      _
    %p195 = scmp.le.s32.totalorder 1, %s11
    %p196 = scmp.lt.s32.totalorder %s11, 3
    %p197 = pnand %p195, %p196
    %p198 = pneg %p197
    // Predicated region
    $region25: #{up_forward.3} parent=5 // pred_check
      _
    $region26: #{up_forward.3} parent=5 // pred_check_branch
      %200 = sbr.rel (%p197) target = $region28
    $region27: #{up_forward.3} parent=5 // pred_region
      %s201 = ssub.s32 %s11, 1
      %s202 = smul.u32 32, %s20
      %p203 = scmp.lt.s32.totalorder %s202, 63
      %s204 = scalar_select %p203, %s202, 63
      %p205 = scmp.lt.s32.totalorder %s21, 0
      %s206 = scalar_select %p205, %s21, 0
      %s207 = sadd.s32 %s206, %s204
      %s208 = smul.addr %s207, 4
      %s209 = scalar_lea.vmem %s0, %s208
      %p210 = pneg %p51
      %p211 = pneg %p48
      %s212 = smul.u32 9, %s21
      %p213 = scmp.lt.s32.totalorder %s212, 8
      %s214 = scalar_select %p213, %s212, 8
      %s215 = smul.addr %s214, 4
      %s216 = scalar_lea.vmem %s1, %s215
      %p217 = pneg %p77
      %p218 = pneg %p74
      %p219 = pneg %p103
      %p220 = pneg %p100
      %s221 = smul.u32 32, %s20
      %p222 = scmp.lt.s32.totalorder %s221, 63
      %s223 = scalar_select %p222, %s221, 63
      %s224 = smul.addr %s223, 4
      %s225 = scalar_lea.vmem %s2, %s224
      %p226 = pneg %p129
      %p227 = pneg %p126
      %p228 = scmp.lt.s32.totalorder %s20, 1
      %s229 = scalar_select %p228, %s20, 1
      %s230 = scalar_lea.vmem %s3, %s229
      %p231 = pneg %p155
      %p232 = pneg %p152
      %p233 = scmp.lt.s32.totalorder %s20, 1
      %s234 = scalar_select %p233, %s20, 1
      %s235 = scalar_lea.vmem %s4, %s234
      %s236 = smul.u32 32, %s20
      %p237 = scmp.lt.s32.totalorder %s236, 63
      %s238 = scalar_select %p237, %s236, 63
      %p239 = scmp.lt.s32.totalorder %s21, 0
      %s240 = scalar_select %p239, %s21, 0
      %s241 = sadd.s32 %s240, %s238
      %s242 = smul.addr %s241, 4
      %s243 = scalar_lea.vmem %s0, %s242
      %s244 = smul.u32 32, %s20
      %s245 = smul.u32 9, %s21
      %p246 = scmp.lt.s32.totalorder %s245, 8
      %s247 = scalar_select %p246, %s245, 8
      %s248 = smul.addr %s247, 4
      %s249 = scalar_lea.vmem %s1, %s248
      %s250 = smul.u32 9, %s21
      %s251 = smul.u32 32, %s20
      %p252 = scmp.lt.s32.totalorder %s251, 63
      %s253 = scalar_select %p252, %s251, 63
      %s254 = smul.addr %s253, 4
      %s255 = scalar_lea.vmem %s2, %s254
      %s256 = smul.u32 32, %s20
      %p257 = scmp.lt.s32.totalorder %s20, 1
      %s258 = scalar_select %p257, %s20, 1
      %s259 = scalar_lea.vmem %s3, %s258
      %p260 = scmp.lt.s32.totalorder %s20, 1
      %s261 = scalar_select %p260, %s20, 1
      %s262 = scalar_lea.vmem %s4, %s261
      %p264 = scmp.eq.s32.totalorder %s21, 0
      // Predicated region
      $region29: #{up_forward.3} parent=27 // pred_check
        %p265 = pneg %p264
      $region30: #{up_forward.3} parent=27 // pred_check_branch
        %267 = sbr.rel (%p265) target = $region32
      $region31: #{up_forward.3} parent=27 // pred_region
        %268 = vst [vmem:[#allocation2] sm:$0xff] 0.0
        %269 = vst [vmem:[#allocation2 + $0x8] sm:$0xff] 0.0
        %270 = vst [vmem:[#allocation2 + $0x10] sm:$0xff] 0.0
        %271 = vst [vmem:[#allocation2 + $0x18] sm:$0xff] 0.0
        %272 = vst [vmem:[#allocation2 + $0x20] sm:$0xff] 0.0
        %273 = vst [vmem:[#allocation2 + $0x28] sm:$0xff] 0.0
        %274 = vst [vmem:[#allocation2 + $0x30] sm:$0xff] 0.0
        %275 = vst [vmem:[#allocation2 + $0x38] sm:$0xff] 0.0
        %276 = vst [vmem:[#allocation2 + $0x40] sm:$0xff] 0.0
        %277 = vst [vmem:[#allocation2 + $0x48] sm:$0xff] 0.0
        %278 = vst [vmem:[#allocation2 + $0x50] sm:$0xff] 0.0
        %279 = vst [vmem:[#allocation2 + $0x58] sm:$0xff] 0.0
        %280 = vst [vmem:[#allocation2 + $0x60] sm:$0xff] 0.0
        %281 = vst [vmem:[#allocation2 + $0x68] sm:$0xff] 0.0
        %282 = vst [vmem:[#allocation2 + $0x70] sm:$0xff] 0.0
        %283 = vst [vmem:[#allocation2 + $0x78] sm:$0xff] 0.0
        %284 = vst [vmem:[#allocation2 + $0x80] sm:$0xff] 0.0
        %285 = vst [vmem:[#allocation2 + $0x88] sm:$0xff] 0.0
        %286 = vst [vmem:[#allocation2 + $0x90] sm:$0xff] 0.0
        %287 = vst [vmem:[#allocation2 + $0x98] sm:$0xff] 0.0
        %288 = vst [vmem:[#allocation2 + $0xa0] sm:$0xff] 0.0
        %289 = vst [vmem:[#allocation2 + $0xa8] sm:$0xff] 0.0
        %290 = vst [vmem:[#allocation2 + $0xb0] sm:$0xff] 0.0
        %291 = vst [vmem:[#allocation2 + $0xb8] sm:$0xff] 0.0
        %292 = vst [vmem:[#allocation2 + $0xc0] sm:$0xff] 0.0
        %293 = vst [vmem:[#allocation2 + $0xc8] sm:$0xff] 0.0
        %294 = vst [vmem:[#allocation2 + $0xd0] sm:$0xff] 0.0
        %295 = vst [vmem:[#allocation2 + $0xd8] sm:$0xff] 0.0
        %296 = vst [vmem:[#allocation2 + $0xe0] sm:$0xff] 0.0
        %297 = vst [vmem:[#allocation2 + $0xe8] sm:$0xff] 0.0
        %298 = vst [vmem:[#allocation2 + $0xf0] sm:$0xff] 0.0
        %299 = vst [vmem:[#allocation2 + $0xf8] sm:$0xff] 0.0
      $region32: #{up_forward.3} parent=27 // pred_fallthru
        _
      %v300 = vld [vmem:[#allocation2] sm:$0xff]
      %v301 = vld [vmem:[#allocation2 + $0x8] sm:$0xff]
      %v302 = vld [vmem:[#allocation2 + $0x10] sm:$0xff]
      %v303 = vld [vmem:[#allocation2 + $0x18] sm:$0xff]
      %v304 = vld [vmem:[#allocation2 + $0x20] sm:$0xff]
      %v305 = vld [vmem:[#allocation2 + $0x28] sm:$0xff]
      %v306 = vld [vmem:[#allocation2 + $0x30] sm:$0xff]
      %v307 = vld [vmem:[#allocation2 + $0x38] sm:$0xff]
      %v308 = vld [vmem:[#allocation2 + $0x40] sm:$0xff]
      %v309 = vld [vmem:[#allocation2 + $0x48] sm:$0xff]
      %v310 = vld [vmem:[#allocation2 + $0x50] sm:$0xff]
      %v311 = vld [vmem:[#allocation2 + $0x58] sm:$0xff]
      %v312 = vld [vmem:[#allocation2 + $0x60] sm:$0xff]
      %v313 = vld [vmem:[#allocation2 + $0x68] sm:$0xff]
      %v314 = vld [vmem:[#allocation2 + $0x70] sm:$0xff]
      %v315 = vld [vmem:[#allocation2 + $0x78] sm:$0xff]
      %v316 = vld [vmem:[#allocation2 + $0x80] sm:$0xff]
      %v317 = vld [vmem:[#allocation2 + $0x88] sm:$0xff]
      %v318 = vld [vmem:[#allocation2 + $0x90] sm:$0xff]
      %v319 = vld [vmem:[#allocation2 + $0x98] sm:$0xff]
      %v320 = vld [vmem:[#allocation2 + $0xa0] sm:$0xff]
      %v321 = vld [vmem:[#allocation2 + $0xa8] sm:$0xff]
      %v322 = vld [vmem:[#allocation2 + $0xb0] sm:$0xff]
      %v323 = vld [vmem:[#allocation2 + $0xb8] sm:$0xff]
      %v324 = vld [vmem:[#allocation2 + $0xc0] sm:$0xff]
      %v325 = vld [vmem:[#allocation2 + $0xc8] sm:$0xff]
      %v326 = vld [vmem:[#allocation2 + $0xd0] sm:$0xff]
      %v327 = vld [vmem:[#allocation2 + $0xd8] sm:$0xff]
      %v328 = vld [vmem:[#allocation2 + $0xe0] sm:$0xff]
      %v329 = vld [vmem:[#allocation2 + $0xe8] sm:$0xff]
      %v330 = vld [vmem:[#allocation2 + $0xf0] sm:$0xff]
      %v331 = vld [vmem:[#allocation2 + $0xf8] sm:$0xff]
      %v332 = vld [vmem:[%s243] sm:$0xf]
      %v333 = vld [vmem:[%s243 + $0x4] sm:$0xf]
      %v334 = vld [vmem:[%s243 + $0x8] sm:$0xf]
      %v335 = vld [vmem:[%s243 + $0xc] sm:$0xf]
      %v336 = vld [vmem:[%s243 + $0x10] sm:$0xf]
      %v337 = vld [vmem:[%s243 + $0x14] sm:$0xf]
      %v338 = vld [vmem:[%s243 + $0x18] sm:$0xf]
      %v339 = vld [vmem:[%s243 + $0x1c] sm:$0xf]
      %v340 = vld [vmem:[%s243 + $0x20] sm:$0xf]
      %v341 = vld [vmem:[%s243 + $0x24] sm:$0xf]
      %v342 = vld [vmem:[%s243 + $0x28] sm:$0xf]
      %v343 = vld [vmem:[%s243 + $0x2c] sm:$0xf]
      %v344 = vld [vmem:[%s243 + $0x30] sm:$0xf]
      %v345 = vld [vmem:[%s243 + $0x34] sm:$0xf]
      %v346 = vld [vmem:[%s243 + $0x38] sm:$0xf]
      %v347 = vld [vmem:[%s243 + $0x3c] sm:$0xf]
      %v348 = vld [vmem:[%s243 + $0x40] sm:$0xf]
      %v349 = vld [vmem:[%s243 + $0x44] sm:$0xf]
      %v350 = vld [vmem:[%s243 + $0x48] sm:$0xf]
      %v351 = vld [vmem:[%s243 + $0x4c] sm:$0xf]
      %v352 = vld [vmem:[%s243 + $0x50] sm:$0xf]
      %v353 = vld [vmem:[%s243 + $0x54] sm:$0xf]
      %v354 = vld [vmem:[%s243 + $0x58] sm:$0xf]
      %v355 = vld [vmem:[%s243 + $0x5c] sm:$0xf]
      %v356 = vld [vmem:[%s243 + $0x60] sm:$0xf]
      %v357 = vld [vmem:[%s243 + $0x64] sm:$0xf]
      %v358 = vld [vmem:[%s243 + $0x68] sm:$0xf]
      %v359 = vld [vmem:[%s243 + $0x6c] sm:$0xf]
      %v360 = vld [vmem:[%s243 + $0x70] sm:$0xf]
      %v361 = vld [vmem:[%s243 + $0x74] sm:$0xf]
      %v362 = vld [vmem:[%s243 + $0x78] sm:$0xf]
      %v363 = vld [vmem:[%s243 + $0x7c] sm:$0xf]
      %v364 = vld [vmem:[%s249] sm:$0xf]
      %v365 = vld [vmem:[%s249 + $0x4] sm:$0xf]
      %v366 = vld [vmem:[%s249 + $0x8] sm:$0xf]
      %v367 = vld [vmem:[%s249 + $0xc] sm:$0xf]
      %v368 = vld [vmem:[%s249 + $0x10] sm:$0xf]
      %v369 = vld [vmem:[%s249 + $0x14] sm:$0xf]
      %v370 = vld [vmem:[%s249 + $0x18] sm:$0xf]
      %v371 = vld [vmem:[%s249 + $0x1c] sm:$0xf]
      %v372 = vld [vmem:[%s249 + $0x20] sm:$0xf]
      %v405 = vunpack.c.l.b16 %v332
      %v406 = vunpack.c.l.b16 %v333
      %v407 = vunpack.c.l.b16 %v334
      %v408 = vunpack.c.l.b16 %v335
      %v409 = vunpack.c.l.b16 %v336
      %v410 = vunpack.c.l.b16 %v337
      %v411 = vunpack.c.l.b16 %v338
      %v412 = vunpack.c.l.b16 %v339
      %v413 = vunpack.c.l.b16 %v340
      %v414 = vunpack.c.l.b16 %v341
      %v415 = vunpack.c.l.b16 %v342
      %v416 = vunpack.c.l.b16 %v343
      %v417 = vunpack.c.l.b16 %v344
      %v418 = vunpack.c.l.b16 %v345
      %v419 = vunpack.c.l.b16 %v346
      %v420 = vunpack.c.l.b16 %v347
      %v421 = vunpack.c.l.b16 %v348
      %v422 = vunpack.c.l.b16 %v349
      %v423 = vunpack.c.l.b16 %v350
      %v424 = vunpack.c.l.b16 %v351
      %v425 = vunpack.c.l.b16 %v352
      %v426 = vunpack.c.l.b16 %v353
      %v427 = vunpack.c.l.b16 %v354
      %v428 = vunpack.c.l.b16 %v355
      %v429 = vunpack.c.l.b16 %v356
      %v430 = vunpack.c.l.b16 %v357
      %v431 = vunpack.c.l.b16 %v358
      %v432 = vunpack.c.l.b16 %v359
      %v433 = vunpack.c.l.b16 %v360
      %v434 = vunpack.c.l.b16 %v361
      %v435 = vunpack.c.l.b16 %v362
      %v436 = vunpack.c.l.b16 %v363
      %v437 = vpack.c.b16 %v406, %v405
      %v438 = vpack.c.b16 %v408, %v407
      %v439 = vpack.c.b16 %v410, %v409
      %v440 = vpack.c.b16 %v412, %v411
      %v441 = vpack.c.b16 %v414, %v413
      %v442 = vpack.c.b16 %v416, %v415
      %v443 = vpack.c.b16 %v418, %v417
      %v444 = vpack.c.b16 %v420, %v419
      %v445 = vpack.c.b16 %v422, %v421
      %v446 = vpack.c.b16 %v424, %v423
      %v447 = vpack.c.b16 %v426, %v425
      %v448 = vpack.c.b16 %v428, %v427
      %v449 = vpack.c.b16 %v430, %v429
      %v450 = vpack.c.b16 %v432, %v431
      %v451 = vpack.c.b16 %v434, %v433
      %v452 = vpack.c.b16 %v436, %v435
      %v462 = vunpack.c.l.b16 %v364
      %v463 = vunpack.c.l.b16 %v365
      %v464 = vunpack.c.l.b16 %v366
      %v465 = vunpack.c.l.b16 %v367
      %v466 = vunpack.c.l.b16 %v368
      %v467 = vunpack.c.l.b16 %v369
      %v468 = vunpack.c.l.b16 %v370
      %v469 = vunpack.c.l.b16 %v371
      %v470 = vunpack.c.l.b16 %v372
      %v471 = vpack.c.b16 %v463, %v462
      %v472 = vpack.c.b16 %v465, %v464
      %v473 = vpack.c.b16 %v467, %v466
      %v474 = vpack.c.b16 %v469, %v468
      %v475 = vpack.c.b16 %v470, %v470
      %vm480 = vcmask 588800
      %v482 = vsel %vm480, %v437, 0
      %v485 = vsel %vm480, %v438, 0
      %v488 = vsel %vm480, %v439, 0
      %v491 = vsel %vm480, %v440, 0
      %v494 = vsel %vm480, %v441, 0
      %v497 = vsel %vm480, %v442, 0
      %v500 = vsel %vm480, %v443, 0
      %v503 = vsel %vm480, %v444, 0
      %v506 = vsel %vm480, %v445, 0
      %v509 = vsel %vm480, %v446, 0
      %v512 = vsel %vm480, %v447, 0
      %v515 = vsel %vm480, %v448, 0
      %v518 = vsel %vm480, %v449, 0
      %v521 = vsel %vm480, %v450, 0
      %v524 = vsel %vm480, %v451, 0
      %v527 = vsel %vm480, %v452, 0
      %vm529 = vcmask 1043456
      %v531 = vsel %vm529, %v475, 0
      %533 = vmatprep.subr.bf16.mxu0 0
      %534 = vmatpush1.bf16.msra.mxu0 %v471
      %535 = vmatprep.subr.bf16.mxu0 0
      %536 = vmatpush1.bf16.msra.mxu0 %v472
      %537 = vmatprep.subr.bf16.mxu0 0
      %538 = vmatpush1.bf16.msra.mxu0 %v473
      %539 = vmatprep.subr.bf16.mxu0 0
      %540 = vmatpush1.bf16.msra.mxu0 %v474
      %541 = vmatprep.subr.bf16.mxu0 0
      %542 = vmatpush1.bf16.msra.mxu0 %v531
      %543 = vmatprep.subr.bf16.mxu0 0
      %544 = vmatpush1.bf16.msra.mxu0 0
      %545 = vmatprep.subr.bf16.mxu0 0
      %546 = vmatpush1.bf16.msra.mxu0 0
      %547 = vmatprep.subr.bf16.mxu0 0
      %548 = vmatpush1.bf16.msra.mxu0 0
      %549 = vmatprep.subr.bf16.mxu0 0
      %550 = vmatpush1.bf16.msra.mxu0 0
      %551 = vmatprep.subr.bf16.mxu0 0
      %552 = vmatpush1.bf16.msra.mxu0 0
      %553 = vmatprep.subr.bf16.mxu0 0
      %554 = vmatpush1.bf16.msra.mxu0 0
      %555 = vmatprep.subr.bf16.mxu0 0
      %556 = vmatpush1.bf16.msra.mxu0 0
      %557 = vmatprep.subr.bf16.mxu0 0
      %558 = vmatpush1.bf16.msra.mxu0 0
      %559 = vmatprep.subr.bf16.mxu0 0
      %560 = vmatpush1.bf16.msra.mxu0 0
      %561 = vmatprep.subr.bf16.mxu0 0
      %562 = vmatpush1.bf16.msra.mxu0 0
      %563 = vmatprep.subr.bf16.mxu0 0
      %564 = vmatpush1.bf16.msra.mxu0 0
      %565 = vmatprep.mubr.bf16.mxu0 0
      %566 = vmatmul.mubr.bf16.gmra.mrb[0].mxu0 %v482
      %v567 = vpop.f32.mrb[0].mxu0
      %v568 = vadd.f32 0.0, %v567
      %v569 = vpop.f32.mrb[0].mxu0
      %v570 = vpop.f32.mrb[0].mxu0
      %v571 = vadd.f32 0.0, %v570
      %v572 = vpop.f32.mrb[0].mxu0
      %573 = vmatprep.mubr.bf16.mxu0 0
      %574 = vmatmul.mubr.bf16.gmra.mrb[0].mxu0 %v485
      %v575 = vpop.f32.mrb[0].mxu0
      %v576 = vadd.f32 0.0, %v575
      %v577 = vpop.f32.mrb[0].mxu0
      %v578 = vpop.f32.mrb[0].mxu0
      %v579 = vadd.f32 0.0, %v578
      %v580 = vpop.f32.mrb[0].mxu0
      %581 = vmatprep.mubr.bf16.mxu0 0
      %582 = vmatmul.mubr.bf16.gmra.mrb[0].mxu0 %v488
      %v583 = vpop.f32.mrb[0].mxu0
      %v584 = vadd.f32 0.0, %v583
      %v585 = vpop.f32.mrb[0].mxu0
      %v586 = vpop.f32.mrb[0].mxu0
      %v587 = vadd.f32 0.0, %v586
      %v588 = vpop.f32.mrb[0].mxu0
      %589 = vmatprep.mubr.bf16.mxu0 0
      %590 = vmatmul.mubr.bf16.gmra.mrb[0].mxu0 %v491
      %v591 = vpop.f32.mrb[0].mxu0
      %v592 = vadd.f32 0.0, %v591
      %v593 = vpop.f32.mrb[0].mxu0
      %v594 = vpop.f32.mrb[0].mxu0
      %v595 = vadd.f32 0.0, %v594
      %v596 = vpop.f32.mrb[0].mxu0
      %597 = vmatprep.mubr.bf16.mxu0 0
      %598 = vmatmul.mubr.bf16.gmra.mrb[0].mxu0 %v494
      %v599 = vpop.f32.mrb[0].mxu0
      %v600 = vadd.f32 0.0, %v599
      %v601 = vpop.f32.mrb[0].mxu0
      %v602 = vpop.f32.mrb[0].mxu0
      %v603 = vadd.f32 0.0, %v602
      %v604 = vpop.f32.mrb[0].mxu0
      %605 = vmatprep.mubr.bf16.mxu0 0
      %606 = vmatmul.mubr.bf16.gmra.mrb[0].mxu0 %v497
      %v607 = vpop.f32.mrb[0].mxu0
      %v608 = vadd.f32 0.0, %v607
      %v609 = vpop.f32.mrb[0].mxu0
      %v610 = vpop.f32.mrb[0].mxu0
      %v611 = vadd.f32 0.0, %v610
      %v612 = vpop.f32.mrb[0].mxu0
      %613 = vmatprep.mubr.bf16.mxu0 0
      %614 = vmatmul.mubr.bf16.gmra.mrb[0].mxu0 %v500
      %v615 = vpop.f32.mrb[0].mxu0
      %v616 = vadd.f32 0.0, %v615
      %v617 = vpop.f32.mrb[0].mxu0
      %v618 = vpop.f32.mrb[0].mxu0
      %v619 = vadd.f32 0.0, %v618
      %v620 = vpop.f32.mrb[0].mxu0
      %621 = vmatprep.mubr.bf16.mxu0 0
      %622 = vmatmul.mubr.bf16.gmra.mrb[0].mxu0 %v503
      %v623 = vpop.f32.mrb[0].mxu0
      %v624 = vadd.f32 0.0, %v623
      %v625 = vpop.f32.mrb[0].mxu0
      %v626 = vpop.f32.mrb[0].mxu0
      %v627 = vadd.f32 0.0, %v626
      %v628 = vpop.f32.mrb[0].mxu0
      %629 = vmatprep.mubr.bf16.mxu0 0
      %630 = vmatmul.mubr.bf16.gmra.mrb[0].mxu0 %v506
      %v631 = vpop.f32.mrb[0].mxu0
      %v632 = vadd.f32 0.0, %v631
      %v633 = vpop.f32.mrb[0].mxu0
      %v634 = vpop.f32.mrb[0].mxu0
      %v635 = vadd.f32 0.0, %v634
      %v636 = vpop.f32.mrb[0].mxu0
      %637 = vmatprep.mubr.bf16.mxu0 0
      %638 = vmatmul.mubr.bf16.gmra.mrb[0].mxu0 %v509
      %v639 = vpop.f32.mrb[0].mxu0
      %v640 = vadd.f32 0.0, %v639
      %v641 = vpop.f32.mrb[0].mxu0
      %v642 = vpop.f32.mrb[0].mxu0
      %v643 = vadd.f32 0.0, %v642
      %v644 = vpop.f32.mrb[0].mxu0
      %645 = vmatprep.mubr.bf16.mxu0 0
      %646 = vmatmul.mubr.bf16.gmra.mrb[0].mxu0 %v512
      %v647 = vpop.f32.mrb[0].mxu0
      %v648 = vadd.f32 0.0, %v647
      %v649 = vpop.f32.mrb[0].mxu0
      %v650 = vpop.f32.mrb[0].mxu0
      %v651 = vadd.f32 0.0, %v650
      %v652 = vpop.f32.mrb[0].mxu0
      %653 = vmatprep.mubr.bf16.mxu0 0
      %654 = vmatmul.mubr.bf16.gmra.mrb[0].mxu0 %v515
      %v655 = vpop.f32.mrb[0].mxu0
      %v656 = vadd.f32 0.0, %v655
      %v657 = vpop.f32.mrb[0].mxu0
      %v658 = vpop.f32.mrb[0].mxu0
      %v659 = vadd.f32 0.0, %v658
      %v660 = vpop.f32.mrb[0].mxu0
      %661 = vmatprep.mubr.bf16.mxu0 0
      %662 = vmatmul.mubr.bf16.gmra.mrb[0].mxu0 %v518
      %v663 = vpop.f32.mrb[0].mxu0
      %v664 = vadd.f32 0.0, %v663
      %v665 = vpop.f32.mrb[0].mxu0
      %v666 = vpop.f32.mrb[0].mxu0
      %v667 = vadd.f32 0.0, %v666
      %v668 = vpop.f32.mrb[0].mxu0
      %669 = vmatprep.mubr.bf16.mxu0 0
      %670 = vmatmul.mubr.bf16.gmra.mrb[0].mxu0 %v521
      %v671 = vpop.f32.mrb[0].mxu0
      %v672 = vadd.f32 0.0, %v671
      %v673 = vpop.f32.mrb[0].mxu0
      %v674 = vpop.f32.mrb[0].mxu0
      %v675 = vadd.f32 0.0, %v674
      %v676 = vpop.f32.mrb[0].mxu0
      %677 = vmatprep.mubr.bf16.mxu0 0
      %678 = vmatmul.mubr.bf16.gmra.mrb[0].mxu0 %v524
      %v679 = vpop.f32.mrb[0].mxu0
      %v680 = vadd.f32 0.0, %v679
      %v681 = vpop.f32.mrb[0].mxu0
      %v682 = vpop.f32.mrb[0].mxu0
      %v683 = vadd.f32 0.0, %v682
      %v684 = vpop.f32.mrb[0].mxu0
      %685 = vmatprep.mubr.bf16.mxu0 0
      %686 = vmatmul.mubr.bf16.gmra.mrb[0].mxu0 %v527
      %v687 = vpop.f32.mrb[0].mxu0
      %v688 = vadd.f32 0.0, %v687
      %v689 = vpop.f32.mrb[0].mxu0
      %v690 = vpop.f32.mrb[0].mxu0
      %v691 = vadd.f32 0.0, %v690
      %v692 = vpop.f32.mrb[0].mxu0
      %693 = vdwg.mxu0
      %v694 = vadd.f32 %v300, %v568
      %v695 = vadd.f32 %v301, %v571
      %v696 = vadd.f32 %v302, %v576
      %v697 = vadd.f32 %v303, %v579
      %v698 = vadd.f32 %v304, %v584
      %v699 = vadd.f32 %v305, %v587
      %v700 = vadd.f32 %v306, %v592
      %v701 = vadd.f32 %v307, %v595
      %v702 = vadd.f32 %v308, %v600
      %v703 = vadd.f32 %v309, %v603
      %v704 = vadd.f32 %v310, %v608
      %v705 = vadd.f32 %v311, %v611
      %v706 = vadd.f32 %v312, %v616
      %v707 = vadd.f32 %v313, %v619
      %v708 = vadd.f32 %v314, %v624
      %v709 = vadd.f32 %v315, %v627
      %v710 = vadd.f32 %v316, %v632
      %v711 = vadd.f32 %v317, %v635
      %v712 = vadd.f32 %v318, %v640
      %v713 = vadd.f32 %v319, %v643
      %v714 = vadd.f32 %v320, %v648
      %v715 = vadd.f32 %v321, %v651
      %v716 = vadd.f32 %v322, %v656
      %v717 = vadd.f32 %v323, %v659
      %v718 = vadd.f32 %v324, %v664
      %v719 = vadd.f32 %v325, %v667
      %v720 = vadd.f32 %v326, %v672
      %v721 = vadd.f32 %v327, %v675
      %v722 = vadd.f32 %v328, %v680
      %v723 = vadd.f32 %v329, %v683
      %v724 = vadd.f32 %v330, %v688
      %v725 = vadd.f32 %v331, %v691
      %726 = vst [vmem:[#allocation2] sm:$0xff] %v694
      %727 = vst [vmem:[#allocation2 + $0x8] sm:$0xff] %v695
      %728 = vst [vmem:[#allocation2 + $0x10] sm:$0xff] %v696
      %729 = vst [vmem:[#allocation2 + $0x18] sm:$0xff] %v697
      %730 = vst [vmem:[#allocation2 + $0x20] sm:$0xff] %v698
      %731 = vst [vmem:[#allocation2 + $0x28] sm:$0xff] %v699
      %732 = vst [vmem:[#allocation2 + $0x30] sm:$0xff] %v700
      %733 = vst [vmem:[#allocation2 + $0x38] sm:$0xff] %v701
      %734 = vst [vmem:[#allocation2 + $0x40] sm:$0xff] %v702
      %735 = vst [vmem:[#allocation2 + $0x48] sm:$0xff] %v703
      %736 = vst [vmem:[#allocation2 + $0x50] sm:$0xff] %v704
      %737 = vst [vmem:[#allocation2 + $0x58] sm:$0xff] %v705
      %738 = vst [vmem:[#allocation2 + $0x60] sm:$0xff] %v706
      %739 = vst [vmem:[#allocation2 + $0x68] sm:$0xff] %v707
      %740 = vst [vmem:[#allocation2 + $0x70] sm:$0xff] %v708
      %741 = vst [vmem:[#allocation2 + $0x78] sm:$0xff] %v709
      %742 = vst [vmem:[#allocation2 + $0x80] sm:$0xff] %v710
      %743 = vst [vmem:[#allocation2 + $0x88] sm:$0xff] %v711
      %744 = vst [vmem:[#allocation2 + $0x90] sm:$0xff] %v712
      %745 = vst [vmem:[#allocation2 + $0x98] sm:$0xff] %v713
      %746 = vst [vmem:[#allocation2 + $0xa0] sm:$0xff] %v714
      %747 = vst [vmem:[#allocation2 + $0xa8] sm:$0xff] %v715
      %748 = vst [vmem:[#allocation2 + $0xb0] sm:$0xff] %v716
      %749 = vst [vmem:[#allocation2 + $0xb8] sm:$0xff] %v717
      %750 = vst [vmem:[#allocation2 + $0xc0] sm:$0xff] %v718
      %751 = vst [vmem:[#allocation2 + $0xc8] sm:$0xff] %v719
      %752 = vst [vmem:[#allocation2 + $0xd0] sm:$0xff] %v720
      %753 = vst [vmem:[#allocation2 + $0xd8] sm:$0xff] %v721
      %754 = vst [vmem:[#allocation2 + $0xe0] sm:$0xff] %v722
      %755 = vst [vmem:[#allocation2 + $0xe8] sm:$0xff] %v723
      %756 = vst [vmem:[#allocation2 + $0xf0] sm:$0xff] %v724
      %757 = vst [vmem:[#allocation2 + $0xf8] sm:$0xff] %v725
      // Predicated region
      $region33: #{up_forward.3} parent=27 // pred_check
        %p758 = pneg %p264
      $region34: #{up_forward.3} parent=27 // pred_check_branch
        %760 = sbr.rel (%p758) target = $region36
      $region35: #{up_forward.3} parent=27 // pred_region
        %v761 = vld [vmem:[#allocation2] sm:$0xff]
        %v762 = vld [vmem:[#allocation2 + $0x8] sm:$0xff]
        %v763 = vld [vmem:[#allocation2 + $0x10] sm:$0xff]
        %v764 = vld [vmem:[#allocation2 + $0x18] sm:$0xff]
        %v765 = vld [vmem:[#allocation2 + $0x20] sm:$0xff]
        %v766 = vld [vmem:[#allocation2 + $0x28] sm:$0xff]
        %v767 = vld [vmem:[#allocation2 + $0x30] sm:$0xff]
        %v768 = vld [vmem:[#allocation2 + $0x38] sm:$0xff]
        %v769 = vld [vmem:[#allocation2 + $0x40] sm:$0xff]
        %v770 = vld [vmem:[#allocation2 + $0x48] sm:$0xff]
        %v771 = vld [vmem:[#allocation2 + $0x50] sm:$0xff]
        %v772 = vld [vmem:[#allocation2 + $0x58] sm:$0xff]
        %v773 = vld [vmem:[#allocation2 + $0x60] sm:$0xff]
        %v774 = vld [vmem:[#allocation2 + $0x68] sm:$0xff]
        %v775 = vld [vmem:[#allocation2 + $0x70] sm:$0xff]
        %v776 = vld [vmem:[#allocation2 + $0x78] sm:$0xff]
        %v777 = vld [vmem:[#allocation2 + $0x80] sm:$0xff]
        %v778 = vld [vmem:[#allocation2 + $0x88] sm:$0xff]
        %v779 = vld [vmem:[#allocation2 + $0x90] sm:$0xff]
        %v780 = vld [vmem:[#allocation2 + $0x98] sm:$0xff]
        %v781 = vld [vmem:[#allocation2 + $0xa0] sm:$0xff]
        %v782 = vld [vmem:[#allocation2 + $0xa8] sm:$0xff]
        %v783 = vld [vmem:[#allocation2 + $0xb0] sm:$0xff]
        %v784 = vld [vmem:[#allocation2 + $0xb8] sm:$0xff]
        %v785 = vld [vmem:[#allocation2 + $0xc0] sm:$0xff]
        %v786 = vld [vmem:[#allocation2 + $0xc8] sm:$0xff]
        %v787 = vld [vmem:[#allocation2 + $0xd0] sm:$0xff]
        %v788 = vld [vmem:[#allocation2 + $0xd8] sm:$0xff]
        %v789 = vld [vmem:[#allocation2 + $0xe0] sm:$0xff]
        %v790 = vld [vmem:[#allocation2 + $0xe8] sm:$0xff]
        %v791 = vld [vmem:[#allocation2 + $0xf0] sm:$0xff]
        %v792 = vld [vmem:[#allocation2 + $0xf8] sm:$0xff]
        %v793 = vpack.c.bf16 %v762, %v761
        %v794 = vpack.c.bf16 %v764, %v763
        %v795 = vpack.c.bf16 %v766, %v765
        %v796 = vpack.c.bf16 %v768, %v767
        %v797 = vpack.c.bf16 %v770, %v769
        %v798 = vpack.c.bf16 %v772, %v771
        %v799 = vpack.c.bf16 %v774, %v773
        %v800 = vpack.c.bf16 %v776, %v775
        %v801 = vpack.c.bf16 %v778, %v777
        %v802 = vpack.c.bf16 %v780, %v779
        %v803 = vpack.c.bf16 %v782, %v781
        %v804 = vpack.c.bf16 %v784, %v783
        %v805 = vpack.c.bf16 %v786, %v785
        %v806 = vpack.c.bf16 %v788, %v787
        %v807 = vpack.c.bf16 %v790, %v789
        %v808 = vpack.c.bf16 %v792, %v791
        %v825 = vunpack.c.l.b16 %v793
        %v826 = vunpack.c.h.b16 %v793
        %v827 = vunpack.c.l.b16 %v794
        %v828 = vunpack.c.h.b16 %v794
        %v829 = vunpack.c.l.b16 %v795
        %v830 = vunpack.c.h.b16 %v795
        %v831 = vunpack.c.l.b16 %v796
        %v832 = vunpack.c.h.b16 %v796
        %v833 = vunpack.c.l.b16 %v797
        %v834 = vunpack.c.h.b16 %v797
        %v835 = vunpack.c.l.b16 %v798
        %v836 = vunpack.c.h.b16 %v798
        %v837 = vunpack.c.l.b16 %v799
        %v838 = vunpack.c.h.b16 %v799
        %v839 = vunpack.c.l.b16 %v800
        %v840 = vunpack.c.h.b16 %v800
        %v841 = vunpack.c.l.b16 %v801
        %v842 = vunpack.c.h.b16 %v801
        %v843 = vunpack.c.l.b16 %v802
        %v844 = vunpack.c.h.b16 %v802
        %v845 = vunpack.c.l.b16 %v803
        %v846 = vunpack.c.h.b16 %v803
        %v847 = vunpack.c.l.b16 %v804
        %v848 = vunpack.c.h.b16 %v804
        %v849 = vunpack.c.l.b16 %v805
        %v850 = vunpack.c.h.b16 %v805
        %v851 = vunpack.c.l.b16 %v806
        %v852 = vunpack.c.h.b16 %v806
        %v853 = vunpack.c.l.b16 %v807
        %v854 = vunpack.c.h.b16 %v807
        %v855 = vunpack.c.l.b16 %v808
        %v856 = vunpack.c.h.b16 %v808
        %v857 = vpack.c.b16 %v825, %v825
        %v858 = vpack.c.b16 %v826, %v826
        %v859 = vpack.c.b16 %v827, %v827
        %v860 = vpack.c.b16 %v828, %v828
        %v861 = vpack.c.b16 %v829, %v829
        %v862 = vpack.c.b16 %v830, %v830
        %v863 = vpack.c.b16 %v831, %v831
        %v864 = vpack.c.b16 %v832, %v832
        %v865 = vpack.c.b16 %v833, %v833
        %v866 = vpack.c.b16 %v834, %v834
        %v867 = vpack.c.b16 %v835, %v835
        %v868 = vpack.c.b16 %v836, %v836
        %v869 = vpack.c.b16 %v837, %v837
        %v870 = vpack.c.b16 %v838, %v838
        %v871 = vpack.c.b16 %v839, %v839
        %v872 = vpack.c.b16 %v840, %v840
        %v873 = vpack.c.b16 %v841, %v841
        %v874 = vpack.c.b16 %v842, %v842
        %v875 = vpack.c.b16 %v843, %v843
        %v876 = vpack.c.b16 %v844, %v844
        %v877 = vpack.c.b16 %v845, %v845
        %v878 = vpack.c.b16 %v846, %v846
        %v879 = vpack.c.b16 %v847, %v847
        %v880 = vpack.c.b16 %v848, %v848
        %v881 = vpack.c.b16 %v849, %v849
        %v882 = vpack.c.b16 %v850, %v850
        %v883 = vpack.c.b16 %v851, %v851
        %v884 = vpack.c.b16 %v852, %v852
        %v885 = vpack.c.b16 %v853, %v853
        %v886 = vpack.c.b16 %v854, %v854
        %v887 = vpack.c.b16 %v855, %v855
        %v888 = vpack.c.b16 %v856, %v856
        %921 = vst [vmem:[%s255] sm:$0xf] %v857
        %922 = vst [vmem:[%s255 + $0x4] sm:$0xf] %v858
        %923 = vst [vmem:[%s255 + $0x8] sm:$0xf] %v859
        %924 = vst [vmem:[%s255 + $0xc] sm:$0xf] %v860
        %925 = vst [vmem:[%s255 + $0x10] sm:$0xf] %v861
        %926 = vst [vmem:[%s255 + $0x14] sm:$0xf] %v862
        %927 = vst [vmem:[%s255 + $0x18] sm:$0xf] %v863
        %928 = vst [vmem:[%s255 + $0x1c] sm:$0xf] %v864
        %929 = vst [vmem:[%s255 + $0x20] sm:$0xf] %v865
        %930 = vst [vmem:[%s255 + $0x24] sm:$0xf] %v866
        %931 = vst [vmem:[%s255 + $0x28] sm:$0xf] %v867
        %932 = vst [vmem:[%s255 + $0x2c] sm:$0xf] %v868
        %933 = vst [vmem:[%s255 + $0x30] sm:$0xf] %v869
        %934 = vst [vmem:[%s255 + $0x34] sm:$0xf] %v870
        %935 = vst [vmem:[%s255 + $0x38] sm:$0xf] %v871
        %936 = vst [vmem:[%s255 + $0x3c] sm:$0xf] %v872
        %937 = vst [vmem:[%s255 + $0x40] sm:$0xf] %v873
        %938 = vst [vmem:[%s255 + $0x44] sm:$0xf] %v874
        %939 = vst [vmem:[%s255 + $0x48] sm:$0xf] %v875
        %940 = vst [vmem:[%s255 + $0x4c] sm:$0xf] %v876
        %941 = vst [vmem:[%s255 + $0x50] sm:$0xf] %v877
        %942 = vst [vmem:[%s255 + $0x54] sm:$0xf] %v878
        %943 = vst [vmem:[%s255 + $0x58] sm:$0xf] %v879
        %944 = vst [vmem:[%s255 + $0x5c] sm:$0xf] %v880
        %945 = vst [vmem:[%s255 + $0x60] sm:$0xf] %v881
        %946 = vst [vmem:[%s255 + $0x64] sm:$0xf] %v882
        %947 = vst [vmem:[%s255 + $0x68] sm:$0xf] %v883
        %948 = vst [vmem:[%s255 + $0x6c] sm:$0xf] %v884
        %949 = vst [vmem:[%s255 + $0x70] sm:$0xf] %v885
        %950 = vst [vmem:[%s255 + $0x74] sm:$0xf] %v886
        %951 = vst [vmem:[%s255 + $0x78] sm:$0xf] %v887
        %952 = vst [vmem:[%s255 + $0x7c] sm:$0xf] %v888
        %v953 = vadd.f32 %v761, %v762
        %v954 = vadd.f32 %v953, %v763
        %v955 = vadd.f32 %v954, %v764
        %v956 = vadd.f32 %v955, %v765
        %v957 = vadd.f32 %v956, %v766
        %v958 = vadd.f32 %v957, %v767
        %v959 = vadd.f32 %v958, %v768
        %v960 = vadd.f32 %v959, %v769
        %v961 = vadd.f32 %v960, %v770
        %v962 = vadd.f32 %v961, %v771
        %v963 = vadd.f32 %v962, %v772
        %v964 = vadd.f32 %v963, %v773
        %v965 = vadd.f32 %v964, %v774
        %v966 = vadd.f32 %v965, %v775
        %v967 = vadd.f32 %v966, %v776
        %v968 = vadd.f32 %v967, %v777
        %v969 = vadd.f32 %v968, %v778
        %v970 = vadd.f32 %v969, %v779
        %v971 = vadd.f32 %v970, %v780
        %v972 = vadd.f32 %v971, %v781
        %v973 = vadd.f32 %v972, %v782
        %v974 = vadd.f32 %v973, %v783
        %v975 = vadd.f32 %v974, %v784
        %v976 = vadd.f32 %v975, %v785
        %v977 = vadd.f32 %v976, %v786
        %v978 = vadd.f32 %v977, %v787
        %v979 = vadd.f32 %v978, %v788
        %v980 = vadd.f32 %v979, %v789
        %v981 = vadd.f32 %v980, %v790
        %v982 = vadd.f32 %v981, %v791
        %v983 = vadd.f32 %v982, %v792
        %v984 = vrot.slane %v983, 4
        %v985 = vadd.f32 %v983, %v984
        %v986 = vrot.slane %v985, 2
        %v987 = vadd.f32 %v985, %v986
        %v988 = vrot.slane %v987, 1
        %v989 = vadd.f32 %v987, %v988
        %990 = vst [vmem:[%s259] sm:$0x1] %v989
        %v991 = vmul.f32 %v761, %v761
        %v992 = vmul.f32 %v762, %v762
        %v993 = vmul.f32 %v763, %v763
        %v994 = vmul.f32 %v764, %v764
        %v995 = vmul.f32 %v765, %v765
        %v996 = vmul.f32 %v766, %v766
        %v997 = vmul.f32 %v767, %v767
        %v998 = vmul.f32 %v768, %v768
        %v999 = vmul.f32 %v769, %v769
        %v1000 = vmul.f32 %v770, %v770
        %v1001 = vmul.f32 %v771, %v771
        %v1002 = vmul.f32 %v772, %v772
        %v1003 = vmul.f32 %v773, %v773
        %v1004 = vmul.f32 %v774, %v774
        %v1005 = vmul.f32 %v775, %v775
        %v1006 = vmul.f32 %v776, %v776
        %v1007 = vmul.f32 %v777, %v777
        %v1008 = vmul.f32 %v778, %v778
        %v1009 = vmul.f32 %v779, %v779
        %v1010 = vmul.f32 %v780, %v780
        %v1011 = vmul.f32 %v781, %v781
        %v1012 = vmul.f32 %v782, %v782
        %v1013 = vmul.f32 %v783, %v783
        %v1014 = vmul.f32 %v784, %v784
        %v1015 = vmul.f32 %v785, %v785
        %v1016 = vmul.f32 %v786, %v786
        %v1017 = vmul.f32 %v787, %v787
        %v1018 = vmul.f32 %v788, %v788
        %v1019 = vmul.f32 %v789, %v789
        %v1020 = vmul.f32 %v790, %v790
        %v1021 = vmul.f32 %v791, %v791
        %v1022 = vmul.f32 %v792, %v792
        %v1023 = vadd.f32 %v991, %v992
        %v1024 = vadd.f32 %v1023, %v993
        %v1025 = vadd.f32 %v1024, %v994
        %v1026 = vadd.f32 %v1025, %v995
        %v1027 = vadd.f32 %v1026, %v996
        %v1028 = vadd.f32 %v1027, %v997
        %v1029 = vadd.f32 %v1028, %v998
        %v1030 = vadd.f32 %v1029, %v999
        %v1031 = vadd.f32 %v1030, %v1000
        %v1032 = vadd.f32 %v1031, %v1001
        %v1033 = vadd.f32 %v1032, %v1002
        %v1034 = vadd.f32 %v1033, %v1003
        %v1035 = vadd.f32 %v1034, %v1004
        %v1036 = vadd.f32 %v1035, %v1005
        %v1037 = vadd.f32 %v1036, %v1006
        %v1038 = vadd.f32 %v1037, %v1007
        %v1039 = vadd.f32 %v1038, %v1008
        %v1040 = vadd.f32 %v1039, %v1009
        %v1041 = vadd.f32 %v1040, %v1010
        %v1042 = vadd.f32 %v1041, %v1011
        %v1043 = vadd.f32 %v1042, %v1012
        %v1044 = vadd.f32 %v1043, %v1013
        %v1045 = vadd.f32 %v1044, %v1014
        %v1046 = vadd.f32 %v1045, %v1015
        %v1047 = vadd.f32 %v1046, %v1016
        %v1048 = vadd.f32 %v1047, %v1017
        %v1049 = vadd.f32 %v1048, %v1018
        %v1050 = vadd.f32 %v1049, %v1019
        %v1051 = vadd.f32 %v1050, %v1020
        %v1052 = vadd.f32 %v1051, %v1021
        %v1053 = vadd.f32 %v1052, %v1022
        %v1054 = vrot.slane %v1053, 4
        %v1055 = vadd.f32 %v1053, %v1054
        %v1056 = vrot.slane %v1055, 2
        %v1057 = vadd.f32 %v1055, %v1056
        %v1058 = vrot.slane %v1057, 1
        %v1059 = vadd.f32 %v1057, %v1058
        %1060 = vst [vmem:[%s262] sm:$0x1] %v1059
      $region36: #{up_forward.3} parent=27 // pred_fallthru
        _
      %s1061 = smul.u32 32, %s20
      %p1062 = scmp.lt.s32.totalorder %s1061, 63
      %s1063 = scalar_select %p1062, %s1061, 63
      %s1064 = smul.addr %s1063, 4
      %s1065 = scalar_lea.vmem %s2, %s1064
      %p1066 = scmp.lt.s32.totalorder %s20, 1
      %s1067 = scalar_select %p1066, %s20, 1
      %s1068 = scalar_lea.vmem %s3, %s1067
      %p1069 = scmp.lt.s32.totalorder %s20, 1
      %s1070 = scalar_select %p1069, %s20, 1
      %s1071 = scalar_lea.vmem %s4, %s1070
      // Predicated region
      $region37: #{up_forward.3} parent=27 // pred_check
        %p1072 = pneg %p100
      $region38: #{up_forward.3} parent=27 // pred_check_branch
        %1074 = sbr.rel (%p1072) target = $region40
      $region39: #{up_forward.3} parent=27 // pred_region
        %s1075 = smul.u32 32, %s20
      $region40: #{up_forward.3} parent=27 // pred_fallthru
        _
      // Predicated region
      $region41: #{up_forward.3} parent=27 // pred_check
        %p1076 = pneg %p126
      $region42: #{up_forward.3} parent=27 // pred_check_branch
        %1078 = sbr.rel (%p1076) target = $region44
      $region43: #{up_forward.3} parent=27 // pred_region
        _
      $region44: #{up_forward.3} parent=27 // pred_fallthru
        _
      // Predicated region
      $region45: #{up_forward.3} parent=27 // pred_check
        %p1079 = pneg %p152
      $region46: #{up_forward.3} parent=27 // pred_check_branch
        %1081 = sbr.rel (%p1079) target = $region48
      $region47: #{up_forward.3} parent=27 // pred_region
        _
      $region48: #{up_forward.3} parent=27 // pred_fallthru
        _
    $region28: #{up_forward.3} parent=5 // pred_fallthru
      _
    %p1082 = scmp.le.s32.totalorder 2, %s11
    // Predicated region
    $region49: #{up_forward.3} parent=5 // pred_check
      %p1083 = pneg %p1082
    $region50: #{up_forward.3} parent=5 // pred_check_branch
      %1085 = sbr.rel (%p1083) target = $region52
    $region51: #{up_forward.3} parent=5 // pred_region
      %s1086 = ssub.s32 %s11, 2
      // Predicated region
      $region53: #{up_forward.3} parent=51 // pred_check
        %p1087 = pneg %p106
      $region54: #{up_forward.3} parent=51 // pred_check_branch
        %1089 = sbr.rel (%p1087) target = $region56
      $region55: #{up_forward.3} parent=51 // pred_region
        %s1090 = smul.u32 32, %s22
        %p1091 = scmp.lt.s32.totalorder %s1090, 63
        %s1092 = scalar_select %p1091, %s1090, 63
        %s1093 = smul.addr %s1092, 4
        %s1094 = scalar_lea.vmem %s2, %s1093
      $region56: #{up_forward.3} parent=51 // pred_fallthru
        _
      // Predicated region
      $region57: #{up_forward.3} parent=51 // pred_check
        %p1095 = pneg %p132
      $region58: #{up_forward.3} parent=51 // pred_check_branch
        %1097 = sbr.rel (%p1095) target = $region60
      $region59: #{up_forward.3} parent=51 // pred_region
        %p1098 = scmp.lt.s32.totalorder %s22, 1
        %s1099 = scalar_select %p1098, %s22, 1
        %s1100 = scalar_lea.vmem %s3, %s1099
      $region60: #{up_forward.3} parent=51 // pred_fallthru
        _
      // Predicated region
      $region61: #{up_forward.3} parent=51 // pred_check
        %p1101 = pneg %p158
      $region62: #{up_forward.3} parent=51 // pred_check_branch
        %1103 = sbr.rel (%p1101) target = $region64
      $region63: #{up_forward.3} parent=51 // pred_region
        %p1104 = scmp.lt.s32.totalorder %s22, 1
        %s1105 = scalar_select %p1104, %s22, 1
        %s1106 = scalar_lea.vmem %s4, %s1105
      $region64: #{up_forward.3} parent=51 // pred_fallthru
        _
    $region52: #{up_forward.3} parent=5 // pred_fallthru
      _
  $region6: #{up_forward.3} parent=0 // loop_footer
    %s15 = sadd.s32 1, %s11
  $region7: #{up_forward.3} parent=0 // loop_footer_branch
    %10 = sbr.rel target = $region3
  $region8: #{up_forward.3} parent=0 // loop_exit
    _

// kernel: up_forward.5
$region0: #{up_forward.5}
  #allocation0 [shape = 'u32[]', space=smem, size = 0x4, offset = 0x4, fixed_abs, tag = 'smem constant byte address 0x4 - core index']
  #allocation1 [shape = 'u32[144,128]{1,0:T(1,128)}', space=vmem, size = 0x12000, scoped, tag = 'internal scratch']
  %s0 = inlined_call_operand.vmem [shape: bf16[512,128], index: 0, kind: input, shape index: {}]
  %s1 = inlined_call_operand.vmem [shape: f32[1,128], index: 1, kind: input, shape index: {}]
  %s2 = inlined_call_operand.vmem [shape: f32[1,128], index: 2, kind: input, shape index: {}]
  %s3 = inlined_call_operand.vmem [shape: f32[512,128], index: 3, kind: output, shape index: {}]
  %s4 = sld [smem:[#allocation0]]
  $region45: #{up_forward.5} parent=0
    _
  %s6 = ssub.s32 1, %s4
  %s7 = scalar_select 0, %s6, %s4
  loop: start=0, step=1, limit=4
  $region2: #{up_forward.5} parent=0 // loop_pre_header
    _
  $region3: #{up_forward.5} parent=0 // loop_header
    %s9 = sphi 0, %s13
    %p10 = scmp.ge.s32.totalorder %s9, 4
    %s19 = sphi 0, %s21
    %s22 = sphi 0, %s19
    %s23 = sphi 0, %s22
    %s39 = sphi 0, %s23
    %s43 = sphi 0, %s43
    %s45 = sphi 0, %s43
    %s46 = sphi 0, %s45
    %s60 = sphi 0, %s46
    %s64 = sphi 0, %s64
    %s66 = sphi 0, %s64
    %s67 = sphi 0, %s66
    %s81 = sphi 0, %s67
    %s87 = sphi 0, %s89
    %s90 = sphi 0, %s87
    %s91 = sphi 0, %s90
    %s107 = sphi 0, %s91
  $region4: #{up_forward.5} parent=0 // loop_header_branch
    %12 = sbr.rel (%p10) target = $region8
  $region5: #{up_forward.5} parent=0 // loop_body
    %s14 = ssub.s32 %s9, 1
    %s15 = ssub.s32 %s9, 2
    %s16 = sadd.s32 %s9, 1
    %s17 = ssub.s32 %s9, %s16
    %p18 = scmp.eq.s32.totalorder %s17, 0
    %s20 = sadd.s32 %s19, 1
    %s21 = scalar_select %p18, %s19, %s20
    %p24 = pneg %p18
    %p25 = scmp.eq.s32.totalorder %s9, 1
    %p26 = por %p24, %p25
    %p27 = scmp.ne.s32.totalorder %s19, %s22
    %p28 = scmp.eq.s32.totalorder %s9, 0
    %p29 = por %p27, %p28
    %p30 = scmp.ne.s32.totalorder %s19, %s22
    %p31 = scmp.eq.s32.totalorder %s14, 1
    %p32 = por %p30, %p31
    %p33 = scmp.ne.s32.totalorder %s22, %s23
    %p34 = scmp.eq.s32.totalorder %s14, 0
    %p35 = por %p33, %p34
    %p36 = scmp.ne.s32.totalorder %s22, %s23
    %p37 = scmp.eq.s32.totalorder %s15, 1
    %p38 = por %p36, %p37
    %p40 = scmp.ne.s32.totalorder %s23, %s39
    %p41 = scmp.eq.s32.totalorder %s15, 0
    %p42 = por %p40, %p41
    %s44 = sadd.s32 %s43, 1
    %p47 = scmp.eq.s32.totalorder %s9, 1
    %p48 = scmp.ne.s32.totalorder %s43, %s45
    %p49 = scmp.eq.s32.totalorder %s9, 0
    %p50 = por %p48, %p49
    %p51 = scmp.ne.s32.totalorder %s43, %s45
    %p52 = scmp.eq.s32.totalorder %s14, 1
    %p53 = por %p51, %p52
    %p54 = scmp.ne.s32.totalorder %s45, %s46
    %p55 = scmp.eq.s32.totalorder %s14, 0
    %p56 = por %p54, %p55
    %p57 = scmp.ne.s32.totalorder %s45, %s46
    %p58 = scmp.eq.s32.totalorder %s15, 1
    %p59 = por %p57, %p58
    %p61 = scmp.ne.s32.totalorder %s46, %s60
    %p62 = scmp.eq.s32.totalorder %s15, 0
    %p63 = por %p61, %p62
    %s65 = sadd.s32 %s64, 1
    %p68 = scmp.eq.s32.totalorder %s9, 1
    %p69 = scmp.ne.s32.totalorder %s64, %s66
    %p70 = scmp.eq.s32.totalorder %s9, 0
    %p71 = por %p69, %p70
    %p72 = scmp.ne.s32.totalorder %s64, %s66
    %p73 = scmp.eq.s32.totalorder %s14, 1
    %p74 = por %p72, %p73
    %p75 = scmp.ne.s32.totalorder %s66, %s67
    %p76 = scmp.eq.s32.totalorder %s14, 0
    %p77 = por %p75, %p76
    %p78 = scmp.ne.s32.totalorder %s66, %s67
    %p79 = scmp.eq.s32.totalorder %s15, 1
    %p80 = por %p78, %p79
    %p82 = scmp.ne.s32.totalorder %s67, %s81
    %p83 = scmp.eq.s32.totalorder %s15, 0
    %p84 = por %p82, %p83
    %s85 = ssub.s32 %s9, %s16
    %p86 = scmp.eq.s32.totalorder %s85, 0
    %s88 = sadd.s32 %s87, 1
    %s89 = scalar_select %p86, %s87, %s88
    %p92 = pneg %p86
    %p93 = scmp.eq.s32.totalorder %s9, 1
    %p94 = por %p92, %p93
    %p95 = scmp.ne.s32.totalorder %s87, %s90
    %p96 = scmp.eq.s32.totalorder %s9, 0
    %p97 = por %p95, %p96
    %p98 = scmp.ne.s32.totalorder %s87, %s90
    %p99 = scmp.eq.s32.totalorder %s14, 1
    %p100 = por %p98, %p99
    %p101 = scmp.ne.s32.totalorder %s90, %s91
    %p102 = scmp.eq.s32.totalorder %s14, 0
    %p103 = por %p101, %p102
    %p104 = scmp.ne.s32.totalorder %s90, %s91
    %p105 = scmp.eq.s32.totalorder %s15, 1
    %p106 = por %p104, %p105
    %p108 = scmp.ne.s32.totalorder %s91, %s107
    %p109 = scmp.eq.s32.totalorder %s15, 0
    %p110 = por %p108, %p109
    %p111 = scmp.le.s32.totalorder 1, %s9
    %p112 = scmp.lt.s32.totalorder %s9, 3
    %p113 = pnand %p111, %p112
    %p114 = pneg %p113
    // Predicated region
    $region9: #{up_forward.5} parent=5 // pred_check
      _
    $region10: #{up_forward.5} parent=5 // pred_check_branch
      %116 = sbr.rel (%p113) target = $region12
    $region11: #{up_forward.5} parent=5 // pred_region
      %s117 = ssub.s32 %s9, 1
      // Predicated region
      $region13: #{up_forward.5} parent=11 // pred_check
        %p118 = pneg %p56
      $region14: #{up_forward.5} parent=11 // pred_check_branch
        %120 = sbr.rel (%p118) target = $region16
      $region15: #{up_forward.5} parent=11 // pred_region
        _
      $region16: #{up_forward.5} parent=11 // pred_fallthru
        _
      // Predicated region
      $region17: #{up_forward.5} parent=11 // pred_check
        %p121 = pneg %p77
      $region18: #{up_forward.5} parent=11 // pred_check_branch
        %123 = sbr.rel (%p121) target = $region20
      $region19: #{up_forward.5} parent=11 // pred_region
        _
      $region20: #{up_forward.5} parent=11 // pred_fallthru
        _
    $region12: #{up_forward.5} parent=5 // pred_fallthru
      _
    %p124 = scmp.lt.s32.totalorder %s9, 2
    // Predicated region
    $region21: #{up_forward.5} parent=5 // pred_check
      %p125 = pneg %p124
    $region22: #{up_forward.5} parent=5 // pred_check_branch
      %127 = sbr.rel (%p125) target = $region24
    $region23: #{up_forward.5} parent=5 // pred_region
      // Predicated region
      $region25: #{up_forward.5} parent=23 // pred_check
        %p128 = pneg %p29
      $region26: #{up_forward.5} parent=23 // pred_check_branch
        %130 = sbr.rel (%p128) target = $region28
      $region27: #{up_forward.5} parent=23 // pred_region
        %s131 = smul.u32 32, %s9
        %p132 = scmp.lt.s32.totalorder %s131, 63
        %s133 = scalar_select %p132, %s131, 63
        %s134 = smul.addr %s133, 4
        %s135 = scalar_lea.vmem %s0, %s134
        %s136 = smul.u32 32, %s9
      $region28: #{up_forward.5} parent=23 // pred_fallthru
        _
    $region24: #{up_forward.5} parent=5 // pred_fallthru
      _
    %p137 = scmp.le.s32.totalorder 1, %s9
    %p138 = scmp.lt.s32.totalorder %s9, 3
    %p139 = pnand %p137, %p138
    %p140 = pneg %p139
    // Predicated region
    $region29: #{up_forward.5} parent=5 // pred_check
      _
    $region30: #{up_forward.5} parent=5 // pred_check_branch
      %142 = sbr.rel (%p139) target = $region32
    $region31: #{up_forward.5} parent=5 // pred_region
      %s143 = ssub.s32 %s9, 1
      %s144 = smul.u32 32, %s14
      %p145 = scmp.lt.s32.totalorder %s144, 63
      %s146 = scalar_select %p145, %s144, 63
      %s147 = smul.addr %s146, 4
      %s148 = scalar_lea.vmem %s0, %s147
      %p149 = pneg %p35
      %p150 = pneg %p32
      %p151 = pneg %p56
      %p152 = pneg %p53
      %p153 = pneg %p77
      %p154 = pneg %p74
      %p155 = pneg %p103
      %p156 = pneg %p100
      %s157 = smul.u32 32, %s14
      %p158 = scmp.lt.s32.totalorder %s157, 63
      %s159 = scalar_select %p158, %s157, 63
      %s160 = smul.addr %s159, 8
      %s161 = scalar_lea.vmem %s3, %s160
      %s162 = smul.u32 32, %s14
      %p163 = scmp.lt.s32.totalorder %s162, 63
      %s164 = scalar_select %p163, %s162, 63
      %s165 = smul.addr %s164, 4
      %s166 = scalar_lea.vmem %s0, %s165
      %s167 = smul.u32 32, %s14
      %s168 = smul.u32 32, %s14
      %p169 = scmp.lt.s32.totalorder %s168, 63
      %s170 = scalar_select %p169, %s168, 63
      %s171 = smul.addr %s170, 8
      %s172 = scalar_lea.vmem %s3, %s171
      %s173 = smul.u32 32, %s14
      %v174 = vld [vmem:[%s166] sm:$0xf]
      %v175 = vld [vmem:[%s166 + $0x4] sm:$0xf]
      %v176 = vld [vmem:[%s166 + $0x8] sm:$0xf]
      %v177 = vld [vmem:[%s166 + $0xc] sm:$0xf]
      %v178 = vld [vmem:[%s166 + $0x10] sm:$0xf]
      %v179 = vld [vmem:[%s166 + $0x14] sm:$0xf]
      %v180 = vld [vmem:[%s166 + $0x18] sm:$0xf]
      %v181 = vld [vmem:[%s166 + $0x1c] sm:$0xf]
      %v182 = vld [vmem:[%s166 + $0x20] sm:$0xf]
      %v183 = vld [vmem:[%s166 + $0x24] sm:$0xf]
      %v184 = vld [vmem:[%s166 + $0x28] sm:$0xf]
      %v185 = vld [vmem:[%s166 + $0x2c] sm:$0xf]
      %v186 = vld [vmem:[%s166 + $0x30] sm:$0xf]
      %v187 = vld [vmem:[%s166 + $0x34] sm:$0xf]
      %v188 = vld [vmem:[%s166 + $0x38] sm:$0xf]
      %v189 = vld [vmem:[%s166 + $0x3c] sm:$0xf]
      %v190 = vld [vmem:[%s166 + $0x40] sm:$0xf]
      %v191 = vld [vmem:[%s166 + $0x44] sm:$0xf]
      %v192 = vld [vmem:[%s166 + $0x48] sm:$0xf]
      %v193 = vld [vmem:[%s166 + $0x4c] sm:$0xf]
      %v194 = vld [vmem:[%s166 + $0x50] sm:$0xf]
      %v195 = vld [vmem:[%s166 + $0x54] sm:$0xf]
      %v196 = vld [vmem:[%s166 + $0x58] sm:$0xf]
      %v197 = vld [vmem:[%s166 + $0x5c] sm:$0xf]
      %v198 = vld [vmem:[%s166 + $0x60] sm:$0xf]
      %v199 = vld [vmem:[%s166 + $0x64] sm:$0xf]
      %v200 = vld [vmem:[%s166 + $0x68] sm:$0xf]
      %v201 = vld [vmem:[%s166 + $0x6c] sm:$0xf]
      %v202 = vld [vmem:[%s166 + $0x70] sm:$0xf]
      %v203 = vld [vmem:[%s166 + $0x74] sm:$0xf]
      %v204 = vld [vmem:[%s166 + $0x78] sm:$0xf]
      %v205 = vld [vmem:[%s166 + $0x7c] sm:$0xf]
      %v206 = vunpack.c.l.bf16 %v174
      %v207 = vunpack.c.l.bf16 %v175
      %v208 = vunpack.c.l.bf16 %v176
      %v209 = vunpack.c.l.bf16 %v177
      %v210 = vunpack.c.l.bf16 %v178
      %v211 = vunpack.c.l.bf16 %v179
      %v212 = vunpack.c.l.bf16 %v180
      %v213 = vunpack.c.l.bf16 %v181
      %v214 = vunpack.c.l.bf16 %v182
      %v215 = vunpack.c.l.bf16 %v183
      %v216 = vunpack.c.l.bf16 %v184
      %v217 = vunpack.c.l.bf16 %v185
      %v218 = vunpack.c.l.bf16 %v186
      %v219 = vunpack.c.l.bf16 %v187
      %v220 = vunpack.c.l.bf16 %v188
      %v221 = vunpack.c.l.bf16 %v189
      %v222 = vunpack.c.l.bf16 %v190
      %v223 = vunpack.c.l.bf16 %v191
      %v224 = vunpack.c.l.bf16 %v192
      %v225 = vunpack.c.l.bf16 %v193
      %v226 = vunpack.c.l.bf16 %v194
      %v227 = vunpack.c.l.bf16 %v195
      %v228 = vunpack.c.l.bf16 %v196
      %v229 = vunpack.c.l.bf16 %v197
      %v230 = vunpack.c.l.bf16 %v198
      %v231 = vunpack.c.l.bf16 %v199
      %v232 = vunpack.c.l.bf16 %v200
      %v233 = vunpack.c.l.bf16 %v201
      %v234 = vunpack.c.l.bf16 %v202
      %v235 = vunpack.c.l.bf16 %v203
      %v236 = vunpack.c.l.bf16 %v204
      %v237 = vunpack.c.l.bf16 %v205
      %v238 = vld [vmem:[%s1] sm:$0x1]
      %v240 = vlaneseq
      %v241 = vshrl.u32 %v240, 7
      %v242 = vsub.s32 0, %v241
      %v243 = vrot.slane %v238, %v242
      %v245 = vmul.f32 %v206, %v243
      %v246 = vmul.f32 %v207, %v243
      %v247 = vmul.f32 %v208, %v243
      %v248 = vmul.f32 %v209, %v243
      %v249 = vmul.f32 %v210, %v243
      %v250 = vmul.f32 %v211, %v243
      %v251 = vmul.f32 %v212, %v243
      %v252 = vmul.f32 %v213, %v243
      %v253 = vmul.f32 %v214, %v243
      %v254 = vmul.f32 %v215, %v243
      %v255 = vmul.f32 %v216, %v243
      %v256 = vmul.f32 %v217, %v243
      %v257 = vmul.f32 %v218, %v243
      %v258 = vmul.f32 %v219, %v243
      %v259 = vmul.f32 %v220, %v243
      %v260 = vmul.f32 %v221, %v243
      %v261 = vmul.f32 %v222, %v243
      %v262 = vmul.f32 %v223, %v243
      %v263 = vmul.f32 %v224, %v243
      %v264 = vmul.f32 %v225, %v243
      %v265 = vmul.f32 %v226, %v243
      %v266 = vmul.f32 %v227, %v243
      %v267 = vmul.f32 %v228, %v243
      %v268 = vmul.f32 %v229, %v243
      %v269 = vmul.f32 %v230, %v243
      %v270 = vmul.f32 %v231, %v243
      %v271 = vmul.f32 %v232, %v243
      %v272 = vmul.f32 %v233, %v243
      %v273 = vmul.f32 %v234, %v243
      %v274 = vmul.f32 %v235, %v243
      %v275 = vmul.f32 %v236, %v243
      %v276 = vmul.f32 %v237, %v243
      %v277 = vld [vmem:[%s2] sm:$0x1]
      %v279 = vlaneseq
      %v280 = vshrl.u32 %v279, 7
      %v281 = vsub.s32 0, %v280
      %v282 = vrot.slane %v277, %v281
      %v284 = vadd.f32 %v245, %v282
      %v285 = vadd.f32 %v246, %v282
      %v286 = vadd.f32 %v247, %v282
      %v287 = vadd.f32 %v248, %v282
      %v288 = vadd.f32 %v249, %v282
      %v289 = vadd.f32 %v250, %v282
      %v290 = vadd.f32 %v251, %v282
      %v291 = vadd.f32 %v252, %v282
      %v292 = vadd.f32 %v253, %v282
      %v293 = vadd.f32 %v254, %v282
      %v294 = vadd.f32 %v255, %v282
      %v295 = vadd.f32 %v256, %v282
      %v296 = vadd.f32 %v257, %v282
      %v297 = vadd.f32 %v258, %v282
      %v298 = vadd.f32 %v259, %v282
      %v299 = vadd.f32 %v260, %v282
      %v300 = vadd.f32 %v261, %v282
      %v301 = vadd.f32 %v262, %v282
      %v302 = vadd.f32 %v263, %v282
      %v303 = vadd.f32 %v264, %v282
      %v304 = vadd.f32 %v265, %v282
      %v305 = vadd.f32 %v266, %v282
      %v306 = vadd.f32 %v267, %v282
      %v307 = vadd.f32 %v268, %v282
      %v308 = vadd.f32 %v269, %v282
      %v309 = vadd.f32 %v270, %v282
      %v310 = vadd.f32 %v271, %v282
      %v311 = vadd.f32 %v272, %v282
      %v312 = vadd.f32 %v273, %v282
      %v313 = vadd.f32 %v274, %v282
      %v314 = vadd.f32 %v275, %v282
      %v315 = vadd.f32 %v276, %v282
      %v316 = vmax.f32 %v284, 0.0
      %v317 = vmax.f32 %v285, 0.0
      %v318 = vmax.f32 %v286, 0.0
      %v319 = vmax.f32 %v287, 0.0
      %v320 = vmax.f32 %v288, 0.0
      %v321 = vmax.f32 %v289, 0.0
      %v322 = vmax.f32 %v290, 0.0
      %v323 = vmax.f32 %v291, 0.0
      %v324 = vmax.f32 %v292, 0.0
      %v325 = vmax.f32 %v293, 0.0
      %v326 = vmax.f32 %v294, 0.0
      %v327 = vmax.f32 %v295, 0.0
      %v328 = vmax.f32 %v296, 0.0
      %v329 = vmax.f32 %v297, 0.0
      %v330 = vmax.f32 %v298, 0.0
      %v331 = vmax.f32 %v299, 0.0
      %v332 = vmax.f32 %v300, 0.0
      %v333 = vmax.f32 %v301, 0.0
      %v334 = vmax.f32 %v302, 0.0
      %v335 = vmax.f32 %v303, 0.0
      %v336 = vmax.f32 %v304, 0.0
      %v337 = vmax.f32 %v305, 0.0
      %v338 = vmax.f32 %v306, 0.0
      %v339 = vmax.f32 %v307, 0.0
      %v340 = vmax.f32 %v308, 0.0
      %v341 = vmax.f32 %v309, 0.0
      %v342 = vmax.f32 %v310, 0.0
      %v343 = vmax.f32 %v311, 0.0
      %v344 = vmax.f32 %v312, 0.0
      %v345 = vmax.f32 %v313, 0.0
      %v346 = vmax.f32 %v314, 0.0
      %v347 = vmax.f32 %v315, 0.0
      %348 = vst [vmem:[%s172] sm:$0xff] %v316
      %349 = vst [vmem:[%s172 + $0x8] sm:$0xff] %v317
      %350 = vst [vmem:[%s172 + $0x10] sm:$0xff] %v318
      %351 = vst [vmem:[%s172 + $0x18] sm:$0xff] %v319
      %352 = vst [vmem:[%s172 + $0x20] sm:$0xff] %v320
      %353 = vst [vmem:[%s172 + $0x28] sm:$0xff] %v321
      %354 = vst [vmem:[%s172 + $0x30] sm:$0xff] %v322
      %355 = vst [vmem:[%s172 + $0x38] sm:$0xff] %v323
      %356 = vst [vmem:[%s172 + $0x40] sm:$0xff] %v324
      %357 = vst [vmem:[%s172 + $0x48] sm:$0xff] %v325
      %358 = vst [vmem:[%s172 + $0x50] sm:$0xff] %v326
      %359 = vst [vmem:[%s172 + $0x58] sm:$0xff] %v327
      %360 = vst [vmem:[%s172 + $0x60] sm:$0xff] %v328
      %361 = vst [vmem:[%s172 + $0x68] sm:$0xff] %v329
      %362 = vst [vmem:[%s172 + $0x70] sm:$0xff] %v330
      %363 = vst [vmem:[%s172 + $0x78] sm:$0xff] %v331
      %364 = vst [vmem:[%s172 + $0x80] sm:$0xff] %v332
      %365 = vst [vmem:[%s172 + $0x88] sm:$0xff] %v333
      %366 = vst [vmem:[%s172 + $0x90] sm:$0xff] %v334
      %367 = vst [vmem:[%s172 + $0x98] sm:$0xff] %v335
      %368 = vst [vmem:[%s172 + $0xa0] sm:$0xff] %v336
      %369 = vst [vmem:[%s172 + $0xa8] sm:$0xff] %v337
      %370 = vst [vmem:[%s172 + $0xb0] sm:$0xff] %v338
      %371 = vst [vmem:[%s172 + $0xb8] sm:$0xff] %v339
      %372 = vst [vmem:[%s172 + $0xc0] sm:$0xff] %v340
      %373 = vst [vmem:[%s172 + $0xc8] sm:$0xff] %v341
      %374 = vst [vmem:[%s172 + $0xd0] sm:$0xff] %v342
      %375 = vst [vmem:[%s172 + $0xd8] sm:$0xff] %v343
      %376 = vst [vmem:[%s172 + $0xe0] sm:$0xff] %v344
      %377 = vst [vmem:[%s172 + $0xe8] sm:$0xff] %v345
      %378 = vst [vmem:[%s172 + $0xf0] sm:$0xff] %v346
      %379 = vst [vmem:[%s172 + $0xf8] sm:$0xff] %v347
      %s380 = smul.u32 32, %s14
      %p381 = scmp.lt.s32.totalorder %s380, 63
      %s382 = scalar_select %p381, %s380, 63
      %s383 = smul.addr %s382, 8
      %s384 = scalar_lea.vmem %s3, %s383
      // Predicated region
      $region33: #{up_forward.5} parent=31 // pred_check
        %p385 = pneg %p100
      $region34: #{up_forward.5} parent=31 // pred_check_branch
        %387 = sbr.rel (%p385) target = $region36
      $region35: #{up_forward.5} parent=31 // pred_region
        %s388 = smul.u32 32, %s14
      $region36: #{up_forward.5} parent=31 // pred_fallthru
        _
    $region32: #{up_forward.5} parent=5 // pred_fallthru
      _
    %p389 = scmp.le.s32.totalorder 2, %s9
    // Predicated region
    $region37: #{up_forward.5} parent=5 // pred_check
      %p390 = pneg %p389
    $region38: #{up_forward.5} parent=5 // pred_check_branch
      %392 = sbr.rel (%p390) target = $region40
    $region39: #{up_forward.5} parent=5 // pred_region
      %s393 = ssub.s32 %s9, 2
      // Predicated region
      $region41: #{up_forward.5} parent=39 // pred_check
        %p394 = pneg %p106
      $region42: #{up_forward.5} parent=39 // pred_check_branch
        %396 = sbr.rel (%p394) target = $region44
      $region43: #{up_forward.5} parent=39 // pred_region
        %s397 = smul.u32 32, %s15
        %p398 = scmp.lt.s32.totalorder %s397, 63
        %s399 = scalar_select %p398, %s397, 63
        %s400 = smul.addr %s399, 8
        %s401 = scalar_lea.vmem %s3, %s400
      $region44: #{up_forward.5} parent=39 // pred_fallthru
        _
    $region40: #{up_forward.5} parent=5 // pred_fallthru
      _
  $region6: #{up_forward.5} parent=0 // loop_footer
    %s13 = sadd.s32 1, %s9
  $region7: #{up_forward.5} parent=0 // loop_footer_branch
    %8 = sbr.rel target = $region3
  $region8: #{up_forward.5} parent=0 // loop_exit
    _

// kernel: up_forward.4
$region0: #{up_forward.4}
  #allocation0 [shape = 'u32[]', space=smem, size = 0x4, offset = 0x4, fixed_abs, tag = 'smem constant byte address 0x4 - core index']
  #allocation1 [shape = 'u32[144,128]{1,0:T(1,128)}', space=vmem, size = 0x12000, scoped, tag = 'internal scratch']
  #allocation2 [shape = 'f32[256,128]{1,0:T(8,128)}', space=vmem, size = 0x20000, scoped, tag = 'scratch operand']
  %s0 = inlined_call_operand.vmem [shape: bf16[512,36], index: 0, kind: input, shape index: {}]
  %s1 = inlined_call_operand.vmem [shape: bf16[36,128], index: 1, kind: input, shape index: {}]
  %s2 = inlined_call_operand.vmem [shape: bf16[512,128], index: 2, kind: output, shape index: {0}]
  %s3 = inlined_call_operand.vmem [shape: f32[2,1,128], index: 3, kind: output, shape index: {1}]
  %s4 = inlined_call_operand.vmem [shape: f32[2,1,128], index: 4, kind: output, shape index: {2}]
  %5 = xla_tuple %s2, %s3, %s4
  %s6 = sld [smem:[#allocation0]]
  $region65: #{up_forward.4} parent=0
    _
  %s8 = ssub.s32 1, %s6
  %s9 = scalar_select 0, %s8, %s6
  loop: start=0, step=1, limit=4
  $region2: #{up_forward.4} parent=0 // loop_pre_header
    _
  $region3: #{up_forward.4} parent=0 // loop_header
    %s11 = sphi 0, %s15
    %p12 = scmp.ge.s32.totalorder %s11, 4
    %s18 = sphi 0, %s30
    %s19 = sphi 0, %s26
    %s20 = sphi 0, %s18
    %s21 = sphi 0, %s19
    %s22 = sphi 0, %s20
    %s23 = sphi 0, %s21
    %s35 = sphi 0, %s37
    %s38 = sphi 0, %s35
    %s39 = sphi 0, %s38
    %s55 = sphi 0, %s39
    %s61 = sphi 0, %s63
    %s64 = sphi 0, %s61
    %s65 = sphi 0, %s64
    %s81 = sphi 0, %s65
    %s87 = sphi 0, %s89
    %s90 = sphi 0, %s87
    %s91 = sphi 0, %s90
    %s107 = sphi 0, %s91
    %s113 = sphi 0, %s115
    %s116 = sphi 0, %s113
    %s117 = sphi 0, %s116
    %s133 = sphi 0, %s117
    %s139 = sphi 0, %s141
    %s142 = sphi 0, %s139
    %s143 = sphi 0, %s142
    %s159 = sphi 0, %s143
  $region4: #{up_forward.4} parent=0 // loop_header_branch
    %14 = sbr.rel (%p12) target = $region8
  $region5: #{up_forward.4} parent=0 // loop_body
    %s16 = ssub.s32 %s11, 1
    %s17 = ssub.s32 %s11, 2
    %s24 = sadd.s32 1, %s19
    %p25 = scmp.ge.s32.totalorder %s24, 1
    %s26 = scalar_select %p25, 0, %s24
    %s27 = sadd.s32 1, %s18
    %s28 = scalar_select %p25, %s27, %s18
    %p29 = scmp.ge.s32.totalorder %s28, 2
    %s30 = scalar_select %p29, 0, %s28
    %s31 = ssub.s32 %s18, %s30
    %s32 = ssub.s32 %s19, %s26
    %s33 = sor.u32 %s31, %s32
    %p34 = scmp.eq.s32.totalorder %s33, 0
    %s36 = sadd.s32 %s35, 1
    %s37 = scalar_select %p34, %s35, %s36
    %p40 = pneg %p34
    %p41 = scmp.eq.s32.totalorder %s11, 1
    %p42 = por %p40, %p41
    %p43 = scmp.ne.s32.totalorder %s35, %s38
    %p44 = scmp.eq.s32.totalorder %s11, 0
    %p45 = por %p43, %p44
    %p46 = scmp.ne.s32.totalorder %s35, %s38
    %p47 = scmp.eq.s32.totalorder %s16, 1
    %p48 = por %p46, %p47
    %p49 = scmp.ne.s32.totalorder %s38, %s39
    %p50 = scmp.eq.s32.totalorder %s16, 0
    %p51 = por %p49, %p50
    %p52 = scmp.ne.s32.totalorder %s38, %s39
    %p53 = scmp.eq.s32.totalorder %s17, 1
    %p54 = por %p52, %p53
    %p56 = scmp.ne.s32.totalorder %s39, %s55
    %p57 = scmp.eq.s32.totalorder %s17, 0
    %p58 = por %p56, %p57
    %s59 = ssub.s32 %s19, %s26
    %p60 = scmp.eq.s32.totalorder %s59, 0
    %s62 = sadd.s32 %s61, 1
    %s63 = scalar_select %p60, %s61, %s62
    %p66 = pneg %p60
    %p67 = scmp.eq.s32.totalorder %s11, 1
    %p68 = por %p66, %p67
    %p69 = scmp.ne.s32.totalorder %s61, %s64
    %p70 = scmp.eq.s32.totalorder %s11, 0
    %p71 = por %p69, %p70
    %p72 = scmp.ne.s32.totalorder %s61, %s64
    %p73 = scmp.eq.s32.totalorder %s16, 1
    %p74 = por %p72, %p73
    %p75 = scmp.ne.s32.totalorder %s64, %s65
    %p76 = scmp.eq.s32.totalorder %s16, 0
    %p77 = por %p75, %p76
    %p78 = scmp.ne.s32.totalorder %s64, %s65
    %p79 = scmp.eq.s32.totalorder %s17, 1
    %p80 = por %p78, %p79
    %p82 = scmp.ne.s32.totalorder %s65, %s81
    %p83 = scmp.eq.s32.totalorder %s17, 0
    %p84 = por %p82, %p83
    %s85 = ssub.s32 %s18, %s30
    %p86 = scmp.eq.s32.totalorder %s85, 0
    %s88 = sadd.s32 %s87, 1
    %s89 = scalar_select %p86, %s87, %s88
    %p92 = pneg %p86
    %p93 = scmp.eq.s32.totalorder %s11, 1
    %p94 = por %p92, %p93
    %p95 = scmp.ne.s32.totalorder %s87, %s90
    %p96 = scmp.eq.s32.totalorder %s11, 0
    %p97 = por %p95, %p96
    %p98 = scmp.ne.s32.totalorder %s87, %s90
    %p99 = scmp.eq.s32.totalorder %s16, 1
    %p100 = por %p98, %p99
    %p101 = scmp.ne.s32.totalorder %s90, %s91
    %p102 = scmp.eq.s32.totalorder %s16, 0
    %p103 = por %p101, %p102
    %p104 = scmp.ne.s32.totalorder %s90, %s91
    %p105 = scmp.eq.s32.totalorder %s17, 1
    %p106 = por %p104, %p105
    %p108 = scmp.ne.s32.totalorder %s91, %s107
    %p109 = scmp.eq.s32.totalorder %s17, 0
    %p110 = por %p108, %p109
    %s111 = ssub.s32 %s18, %s30
    %p112 = scmp.eq.s32.totalorder %s111, 0
    %s114 = sadd.s32 %s113, 1
    %s115 = scalar_select %p112, %s113, %s114
    %p118 = pneg %p112
    %p119 = scmp.eq.s32.totalorder %s11, 1
    %p120 = por %p118, %p119
    %p121 = scmp.ne.s32.totalorder %s113, %s116
    %p122 = scmp.eq.s32.totalorder %s11, 0
    %p123 = por %p121, %p122
    %p124 = scmp.ne.s32.totalorder %s113, %s116
    %p125 = scmp.eq.s32.totalorder %s16, 1
    %p126 = por %p124, %p125
    %p127 = scmp.ne.s32.totalorder %s116, %s117
    %p128 = scmp.eq.s32.totalorder %s16, 0
    %p129 = por %p127, %p128
    %p130 = scmp.ne.s32.totalorder %s116, %s117
    %p131 = scmp.eq.s32.totalorder %s17, 1
    %p132 = por %p130, %p131
    %p134 = scmp.ne.s32.totalorder %s117, %s133
    %p135 = scmp.eq.s32.totalorder %s17, 0
    %p136 = por %p134, %p135
    %s137 = ssub.s32 %s18, %s30
    %p138 = scmp.eq.s32.totalorder %s137, 0
    %s140 = sadd.s32 %s139, 1
    %s141 = scalar_select %p138, %s139, %s140
    %p144 = pneg %p138
    %p145 = scmp.eq.s32.totalorder %s11, 1
    %p146 = por %p144, %p145
    %p147 = scmp.ne.s32.totalorder %s139, %s142
    %p148 = scmp.eq.s32.totalorder %s11, 0
    %p149 = por %p147, %p148
    %p150 = scmp.ne.s32.totalorder %s139, %s142
    %p151 = scmp.eq.s32.totalorder %s16, 1
    %p152 = por %p150, %p151
    %p153 = scmp.ne.s32.totalorder %s142, %s143
    %p154 = scmp.eq.s32.totalorder %s16, 0
    %p155 = por %p153, %p154
    %p156 = scmp.ne.s32.totalorder %s142, %s143
    %p157 = scmp.eq.s32.totalorder %s17, 1
    %p158 = por %p156, %p157
    %p160 = scmp.ne.s32.totalorder %s143, %s159
    %p161 = scmp.eq.s32.totalorder %s17, 0
    %p162 = por %p160, %p161
    %p163 = scmp.le.s32.totalorder 1, %s11
    %p164 = scmp.lt.s32.totalorder %s11, 3
    %p165 = pnand %p163, %p164
    %p166 = pneg %p165
    // Predicated region
    $region9: #{up_forward.4} parent=5 // pred_check
      _
    $region10: #{up_forward.4} parent=5 // pred_check_branch
      %168 = sbr.rel (%p165) target = $region12
    $region11: #{up_forward.4} parent=5 // pred_region
      %s169 = ssub.s32 %s11, 1
      // Predicated region
      $region13: #{up_forward.4} parent=11 // pred_check
        %p170 = pneg %p77
      $region14: #{up_forward.4} parent=11 // pred_check_branch
        %172 = sbr.rel (%p170) target = $region16
      $region15: #{up_forward.4} parent=11 // pred_region
        %s173 = smul.u32 5, %s21
        %p174 = scmp.lt.s32.totalorder %s173, 4
        %s175 = scalar_select %p174, %s173, 4
        %s176 = smul.addr %s175, 4
        %s177 = scalar_lea.vmem %s1, %s176
        %s178 = smul.u32 5, %s21
      $region16: #{up_forward.4} parent=11 // pred_fallthru
        _
    $region12: #{up_forward.4} parent=5 // pred_fallthru
      _
    %p179 = scmp.lt.s32.totalorder %s11, 2
    // Predicated region
    $region17: #{up_forward.4} parent=5 // pred_check
      %p180 = pneg %p179
    $region18: #{up_forward.4} parent=5 // pred_check_branch
      %182 = sbr.rel (%p180) target = $region20
    $region19: #{up_forward.4} parent=5 // pred_region
      // Predicated region
      $region21: #{up_forward.4} parent=19 // pred_check
        %p183 = pneg %p45
      $region22: #{up_forward.4} parent=19 // pred_check_branch
        %185 = sbr.rel (%p183) target = $region24
      $region23: #{up_forward.4} parent=19 // pred_region
        %s186 = smul.u32 32, %s18
        %p187 = scmp.lt.s32.totalorder %s186, 63
        %s188 = scalar_select %p187, %s186, 63
        %p189 = scmp.lt.s32.totalorder %s19, 0
        %s190 = scalar_select %p189, %s19, 0
        %s191 = sadd.s32 %s190, %s188
        %s192 = smul.addr %s191, 4
        %s193 = scalar_lea.vmem %s0, %s192
        %s194 = smul.u32 32, %s18
      $region24: #{up_forward.4} parent=19 // pred_fallthru
        _
    $region20: #{up_forward.4} parent=5 // pred_fallthru
      _
    %p195 = scmp.le.s32.totalorder 1, %s11
    %p196 = scmp.lt.s32.totalorder %s11, 3
    %p197 = pnand %p195, %p196
    %p198 = pneg %p197
    // Predicated region
    $region25: #{up_forward.4} parent=5 // pred_check
      _
    $region26: #{up_forward.4} parent=5 // pred_check_branch
      %200 = sbr.rel (%p197) target = $region28
    $region27: #{up_forward.4} parent=5 // pred_region
      %s201 = ssub.s32 %s11, 1
      %s202 = smul.u32 32, %s20
      %p203 = scmp.lt.s32.totalorder %s202, 63
      %s204 = scalar_select %p203, %s202, 63
      %p205 = scmp.lt.s32.totalorder %s21, 0
      %s206 = scalar_select %p205, %s21, 0
      %s207 = sadd.s32 %s206, %s204
      %s208 = smul.addr %s207, 4
      %s209 = scalar_lea.vmem %s0, %s208
      %p210 = pneg %p51
      %p211 = pneg %p48
      %s212 = smul.u32 5, %s21
      %p213 = scmp.lt.s32.totalorder %s212, 4
      %s214 = scalar_select %p213, %s212, 4
      %s215 = smul.addr %s214, 4
      %s216 = scalar_lea.vmem %s1, %s215
      %p217 = pneg %p77
      %p218 = pneg %p74
      %p219 = pneg %p103
      %p220 = pneg %p100
      %s221 = smul.u32 32, %s20
      %p222 = scmp.lt.s32.totalorder %s221, 63
      %s223 = scalar_select %p222, %s221, 63
      %s224 = smul.addr %s223, 4
      %s225 = scalar_lea.vmem %s2, %s224
      %p226 = pneg %p129
      %p227 = pneg %p126
      %p228 = scmp.lt.s32.totalorder %s20, 1
      %s229 = scalar_select %p228, %s20, 1
      %s230 = scalar_lea.vmem %s3, %s229
      %p231 = pneg %p155
      %p232 = pneg %p152
      %p233 = scmp.lt.s32.totalorder %s20, 1
      %s234 = scalar_select %p233, %s20, 1
      %s235 = scalar_lea.vmem %s4, %s234
      %s236 = smul.u32 32, %s20
      %p237 = scmp.lt.s32.totalorder %s236, 63
      %s238 = scalar_select %p237, %s236, 63
      %p239 = scmp.lt.s32.totalorder %s21, 0
      %s240 = scalar_select %p239, %s21, 0
      %s241 = sadd.s32 %s240, %s238
      %s242 = smul.addr %s241, 4
      %s243 = scalar_lea.vmem %s0, %s242
      %s244 = smul.u32 32, %s20
      %s245 = smul.u32 5, %s21
      %p246 = scmp.lt.s32.totalorder %s245, 4
      %s247 = scalar_select %p246, %s245, 4
      %s248 = smul.addr %s247, 4
      %s249 = scalar_lea.vmem %s1, %s248
      %s250 = smul.u32 5, %s21
      %s251 = smul.u32 32, %s20
      %p252 = scmp.lt.s32.totalorder %s251, 63
      %s253 = scalar_select %p252, %s251, 63
      %s254 = smul.addr %s253, 4
      %s255 = scalar_lea.vmem %s2, %s254
      %s256 = smul.u32 32, %s20
      %p257 = scmp.lt.s32.totalorder %s20, 1
      %s258 = scalar_select %p257, %s20, 1
      %s259 = scalar_lea.vmem %s3, %s258
      %p260 = scmp.lt.s32.totalorder %s20, 1
      %s261 = scalar_select %p260, %s20, 1
      %s262 = scalar_lea.vmem %s4, %s261
      %p264 = scmp.eq.s32.totalorder %s21, 0
      // Predicated region
      $region29: #{up_forward.4} parent=27 // pred_check
        %p265 = pneg %p264
      $region30: #{up_forward.4} parent=27 // pred_check_branch
        %267 = sbr.rel (%p265) target = $region32
      $region31: #{up_forward.4} parent=27 // pred_region
        %268 = vst [vmem:[#allocation2] sm:$0xff] 0.0
        %269 = vst [vmem:[#allocation2 + $0x8] sm:$0xff] 0.0
        %270 = vst [vmem:[#allocation2 + $0x10] sm:$0xff] 0.0
        %271 = vst [vmem:[#allocation2 + $0x18] sm:$0xff] 0.0
        %272 = vst [vmem:[#allocation2 + $0x20] sm:$0xff] 0.0
        %273 = vst [vmem:[#allocation2 + $0x28] sm:$0xff] 0.0
        %274 = vst [vmem:[#allocation2 + $0x30] sm:$0xff] 0.0
        %275 = vst [vmem:[#allocation2 + $0x38] sm:$0xff] 0.0
        %276 = vst [vmem:[#allocation2 + $0x40] sm:$0xff] 0.0
        %277 = vst [vmem:[#allocation2 + $0x48] sm:$0xff] 0.0
        %278 = vst [vmem:[#allocation2 + $0x50] sm:$0xff] 0.0
        %279 = vst [vmem:[#allocation2 + $0x58] sm:$0xff] 0.0
        %280 = vst [vmem:[#allocation2 + $0x60] sm:$0xff] 0.0
        %281 = vst [vmem:[#allocation2 + $0x68] sm:$0xff] 0.0
        %282 = vst [vmem:[#allocation2 + $0x70] sm:$0xff] 0.0
        %283 = vst [vmem:[#allocation2 + $0x78] sm:$0xff] 0.0
        %284 = vst [vmem:[#allocation2 + $0x80] sm:$0xff] 0.0
        %285 = vst [vmem:[#allocation2 + $0x88] sm:$0xff] 0.0
        %286 = vst [vmem:[#allocation2 + $0x90] sm:$0xff] 0.0
        %287 = vst [vmem:[#allocation2 + $0x98] sm:$0xff] 0.0
        %288 = vst [vmem:[#allocation2 + $0xa0] sm:$0xff] 0.0
        %289 = vst [vmem:[#allocation2 + $0xa8] sm:$0xff] 0.0
        %290 = vst [vmem:[#allocation2 + $0xb0] sm:$0xff] 0.0
        %291 = vst [vmem:[#allocation2 + $0xb8] sm:$0xff] 0.0
        %292 = vst [vmem:[#allocation2 + $0xc0] sm:$0xff] 0.0
        %293 = vst [vmem:[#allocation2 + $0xc8] sm:$0xff] 0.0
        %294 = vst [vmem:[#allocation2 + $0xd0] sm:$0xff] 0.0
        %295 = vst [vmem:[#allocation2 + $0xd8] sm:$0xff] 0.0
        %296 = vst [vmem:[#allocation2 + $0xe0] sm:$0xff] 0.0
        %297 = vst [vmem:[#allocation2 + $0xe8] sm:$0xff] 0.0
        %298 = vst [vmem:[#allocation2 + $0xf0] sm:$0xff] 0.0
        %299 = vst [vmem:[#allocation2 + $0xf8] sm:$0xff] 0.0
      $region32: #{up_forward.4} parent=27 // pred_fallthru
        _
      %v300 = vld [vmem:[#allocation2] sm:$0xff]
      %v301 = vld [vmem:[#allocation2 + $0x8] sm:$0xff]
      %v302 = vld [vmem:[#allocation2 + $0x10] sm:$0xff]
      %v303 = vld [vmem:[#allocation2 + $0x18] sm:$0xff]
      %v304 = vld [vmem:[#allocation2 + $0x20] sm:$0xff]
      %v305 = vld [vmem:[#allocation2 + $0x28] sm:$0xff]
      %v306 = vld [vmem:[#allocation2 + $0x30] sm:$0xff]
      %v307 = vld [vmem:[#allocation2 + $0x38] sm:$0xff]
      %v308 = vld [vmem:[#allocation2 + $0x40] sm:$0xff]
      %v309 = vld [vmem:[#allocation2 + $0x48] sm:$0xff]
      %v310 = vld [vmem:[#allocation2 + $0x50] sm:$0xff]
      %v311 = vld [vmem:[#allocation2 + $0x58] sm:$0xff]
      %v312 = vld [vmem:[#allocation2 + $0x60] sm:$0xff]
      %v313 = vld [vmem:[#allocation2 + $0x68] sm:$0xff]
      %v314 = vld [vmem:[#allocation2 + $0x70] sm:$0xff]
      %v315 = vld [vmem:[#allocation2 + $0x78] sm:$0xff]
      %v316 = vld [vmem:[#allocation2 + $0x80] sm:$0xff]
      %v317 = vld [vmem:[#allocation2 + $0x88] sm:$0xff]
      %v318 = vld [vmem:[#allocation2 + $0x90] sm:$0xff]
      %v319 = vld [vmem:[#allocation2 + $0x98] sm:$0xff]
      %v320 = vld [vmem:[#allocation2 + $0xa0] sm:$0xff]
      %v321 = vld [vmem:[#allocation2 + $0xa8] sm:$0xff]
      %v322 = vld [vmem:[#allocation2 + $0xb0] sm:$0xff]
      %v323 = vld [vmem:[#allocation2 + $0xb8] sm:$0xff]
      %v324 = vld [vmem:[#allocation2 + $0xc0] sm:$0xff]
      %v325 = vld [vmem:[#allocation2 + $0xc8] sm:$0xff]
      %v326 = vld [vmem:[#allocation2 + $0xd0] sm:$0xff]
      %v327 = vld [vmem:[#allocation2 + $0xd8] sm:$0xff]
      %v328 = vld [vmem:[#allocation2 + $0xe0] sm:$0xff]
      %v329 = vld [vmem:[#allocation2 + $0xe8] sm:$0xff]
      %v330 = vld [vmem:[#allocation2 + $0xf0] sm:$0xff]
      %v331 = vld [vmem:[#allocation2 + $0xf8] sm:$0xff]
      %v332 = vld [vmem:[%s243] sm:$0xf]
      %v333 = vld [vmem:[%s243 + $0x4] sm:$0xf]
      %v334 = vld [vmem:[%s243 + $0x8] sm:$0xf]
      %v335 = vld [vmem:[%s243 + $0xc] sm:$0xf]
      %v336 = vld [vmem:[%s243 + $0x10] sm:$0xf]
      %v337 = vld [vmem:[%s243 + $0x14] sm:$0xf]
      %v338 = vld [vmem:[%s243 + $0x18] sm:$0xf]
      %v339 = vld [vmem:[%s243 + $0x1c] sm:$0xf]
      %v340 = vld [vmem:[%s243 + $0x20] sm:$0xf]
      %v341 = vld [vmem:[%s243 + $0x24] sm:$0xf]
      %v342 = vld [vmem:[%s243 + $0x28] sm:$0xf]
      %v343 = vld [vmem:[%s243 + $0x2c] sm:$0xf]
      %v344 = vld [vmem:[%s243 + $0x30] sm:$0xf]
      %v345 = vld [vmem:[%s243 + $0x34] sm:$0xf]
      %v346 = vld [vmem:[%s243 + $0x38] sm:$0xf]
      %v347 = vld [vmem:[%s243 + $0x3c] sm:$0xf]
      %v348 = vld [vmem:[%s243 + $0x40] sm:$0xf]
      %v349 = vld [vmem:[%s243 + $0x44] sm:$0xf]
      %v350 = vld [vmem:[%s243 + $0x48] sm:$0xf]
      %v351 = vld [vmem:[%s243 + $0x4c] sm:$0xf]
      %v352 = vld [vmem:[%s243 + $0x50] sm:$0xf]
      %v353 = vld [vmem:[%s243 + $0x54] sm:$0xf]
      %v354 = vld [vmem:[%s243 + $0x58] sm:$0xf]
      %v355 = vld [vmem:[%s243 + $0x5c] sm:$0xf]
      %v356 = vld [vmem:[%s243 + $0x60] sm:$0xf]
      %v357 = vld [vmem:[%s243 + $0x64] sm:$0xf]
      %v358 = vld [vmem:[%s243 + $0x68] sm:$0xf]
      %v359 = vld [vmem:[%s243 + $0x6c] sm:$0xf]
      %v360 = vld [vmem:[%s243 + $0x70] sm:$0xf]
      %v361 = vld [vmem:[%s243 + $0x74] sm:$0xf]
      %v362 = vld [vmem:[%s243 + $0x78] sm:$0xf]
      %v363 = vld [vmem:[%s243 + $0x7c] sm:$0xf]
      %v364 = vld [vmem:[%s249] sm:$0xf]
      %v365 = vld [vmem:[%s249 + $0x4] sm:$0xf]
      %v366 = vld [vmem:[%s249 + $0x8] sm:$0xf]
      %v367 = vld [vmem:[%s249 + $0xc] sm:$0xf]
      %v368 = vld [vmem:[%s249 + $0x10] sm:$0x3]
      %v401 = vunpack.c.l.b16 %v332
      %v402 = vunpack.c.l.b16 %v333
      %v403 = vunpack.c.l.b16 %v334
      %v404 = vunpack.c.l.b16 %v335
      %v405 = vunpack.c.l.b16 %v336
      %v406 = vunpack.c.l.b16 %v337
      %v407 = vunpack.c.l.b16 %v338
      %v408 = vunpack.c.l.b16 %v339
      %v409 = vunpack.c.l.b16 %v340
      %v410 = vunpack.c.l.b16 %v341
      %v411 = vunpack.c.l.b16 %v342
      %v412 = vunpack.c.l.b16 %v343
      %v413 = vunpack.c.l.b16 %v344
      %v414 = vunpack.c.l.b16 %v345
      %v415 = vunpack.c.l.b16 %v346
      %v416 = vunpack.c.l.b16 %v347
      %v417 = vunpack.c.l.b16 %v348
      %v418 = vunpack.c.l.b16 %v349
      %v419 = vunpack.c.l.b16 %v350
      %v420 = vunpack.c.l.b16 %v351
      %v421 = vunpack.c.l.b16 %v352
      %v422 = vunpack.c.l.b16 %v353
      %v423 = vunpack.c.l.b16 %v354
      %v424 = vunpack.c.l.b16 %v355
      %v425 = vunpack.c.l.b16 %v356
      %v426 = vunpack.c.l.b16 %v357
      %v427 = vunpack.c.l.b16 %v358
      %v428 = vunpack.c.l.b16 %v359
      %v429 = vunpack.c.l.b16 %v360
      %v430 = vunpack.c.l.b16 %v361
      %v431 = vunpack.c.l.b16 %v362
      %v432 = vunpack.c.l.b16 %v363
      %v433 = vpack.c.b16 %v402, %v401
      %v434 = vpack.c.b16 %v404, %v403
      %v435 = vpack.c.b16 %v406, %v405
      %v436 = vpack.c.b16 %v408, %v407
      %v437 = vpack.c.b16 %v410, %v409
      %v438 = vpack.c.b16 %v412, %v411
      %v439 = vpack.c.b16 %v414, %v413
      %v440 = vpack.c.b16 %v416, %v415
      %v441 = vpack.c.b16 %v418, %v417
      %v442 = vpack.c.b16 %v420, %v419
      %v443 = vpack.c.b16 %v422, %v421
      %v444 = vpack.c.b16 %v424, %v423
      %v445 = vpack.c.b16 %v426, %v425
      %v446 = vpack.c.b16 %v428, %v427
      %v447 = vpack.c.b16 %v430, %v429
      %v448 = vpack.c.b16 %v432, %v431
      %v454 = vunpack.c.l.b16 %v364
      %v455 = vunpack.c.l.b16 %v365
      %v456 = vunpack.c.l.b16 %v366
      %v457 = vunpack.c.l.b16 %v367
      %v458 = vunpack.c.l.b16 %v368
      %v459 = vpack.c.b16 %v455, %v454
      %v460 = vpack.c.b16 %v457, %v456
      %v461 = vpack.c.b16 %v458, %v458
      %vm464 = vcmask 293888
      %v466 = vsel %vm464, %v433, 0
      %v469 = vsel %vm464, %v434, 0
      %v472 = vsel %vm464, %v435, 0
      %v475 = vsel %vm464, %v436, 0
      %v478 = vsel %vm464, %v437, 0
      %v481 = vsel %vm464, %v438, 0
      %v484 = vsel %vm464, %v439, 0
      %v487 = vsel %vm464, %v440, 0
      %v490 = vsel %vm464, %v441, 0
      %v493 = vsel %vm464, %v442, 0
      %v496 = vsel %vm464, %v443, 0
      %v499 = vsel %vm464, %v444, 0
      %v502 = vsel %vm464, %v445, 0
      %v505 = vsel %vm464, %v446, 0
      %v508 = vsel %vm464, %v447, 0
      %v511 = vsel %vm464, %v448, 0
      %vm513 = vcmask 1041408
      %v515 = vsel %vm513, %v461, 0
      %517 = vmatprep.subr.bf16.mxu0 0
      %518 = vmatpush1.bf16.msra.mxu0 %v459
      %519 = vmatprep.subr.bf16.mxu0 0
      %520 = vmatpush1.bf16.msra.mxu0 %v460
      %521 = vmatprep.subr.bf16.mxu0 0
      %522 = vmatpush1.bf16.msra.mxu0 %v515
      %523 = vmatprep.subr.bf16.mxu0 0
      %524 = vmatpush1.bf16.msra.mxu0 0
      %525 = vmatprep.subr.bf16.mxu0 0
      %526 = vmatpush1.bf16.msra.mxu0 0
      %527 = vmatprep.subr.bf16.mxu0 0
      %528 = vmatpush1.bf16.msra.mxu0 0
      %529 = vmatprep.subr.bf16.mxu0 0
      %530 = vmatpush1.bf16.msra.mxu0 0
      %531 = vmatprep.subr.bf16.mxu0 0
      %532 = vmatpush1.bf16.msra.mxu0 0
      %533 = vmatprep.subr.bf16.mxu0 0
      %534 = vmatpush1.bf16.msra.mxu0 0
      %535 = vmatprep.subr.bf16.mxu0 0
      %536 = vmatpush1.bf16.msra.mxu0 0
      %537 = vmatprep.subr.bf16.mxu0 0
      %538 = vmatpush1.bf16.msra.mxu0 0
      %539 = vmatprep.subr.bf16.mxu0 0
      %540 = vmatpush1.bf16.msra.mxu0 0
      %541 = vmatprep.subr.bf16.mxu0 0
      %542 = vmatpush1.bf16.msra.mxu0 0
      %543 = vmatprep.subr.bf16.mxu0 0
      %544 = vmatpush1.bf16.msra.mxu0 0
      %545 = vmatprep.subr.bf16.mxu0 0
      %546 = vmatpush1.bf16.msra.mxu0 0
      %547 = vmatprep.subr.bf16.mxu0 0
      %548 = vmatpush1.bf16.msra.mxu0 0
      %549 = vmatprep.mubr.bf16.mxu0 0
      %550 = vmatmul.mubr.bf16.gmra.mrb[0].mxu0 %v466
      %v551 = vpop.f32.mrb[0].mxu0
      %v552 = vadd.f32 0.0, %v551
      %v553 = vpop.f32.mrb[0].mxu0
      %v554 = vpop.f32.mrb[0].mxu0
      %v555 = vadd.f32 0.0, %v554
      %v556 = vpop.f32.mrb[0].mxu0
      %557 = vmatprep.mubr.bf16.mxu0 0
      %558 = vmatmul.mubr.bf16.gmra.mrb[0].mxu0 %v469
      %v559 = vpop.f32.mrb[0].mxu0
      %v560 = vadd.f32 0.0, %v559
      %v561 = vpop.f32.mrb[0].mxu0
      %v562 = vpop.f32.mrb[0].mxu0
      %v563 = vadd.f32 0.0, %v562
      %v564 = vpop.f32.mrb[0].mxu0
      %565 = vmatprep.mubr.bf16.mxu0 0
      %566 = vmatmul.mubr.bf16.gmra.mrb[0].mxu0 %v472
      %v567 = vpop.f32.mrb[0].mxu0
      %v568 = vadd.f32 0.0, %v567
      %v569 = vpop.f32.mrb[0].mxu0
      %v570 = vpop.f32.mrb[0].mxu0
      %v571 = vadd.f32 0.0, %v570
      %v572 = vpop.f32.mrb[0].mxu0
      %573 = vmatprep.mubr.bf16.mxu0 0
      %574 = vmatmul.mubr.bf16.gmra.mrb[0].mxu0 %v475
      %v575 = vpop.f32.mrb[0].mxu0
      %v576 = vadd.f32 0.0, %v575
      %v577 = vpop.f32.mrb[0].mxu0
      %v578 = vpop.f32.mrb[0].mxu0
      %v579 = vadd.f32 0.0, %v578
      %v580 = vpop.f32.mrb[0].mxu0
      %581 = vmatprep.mubr.bf16.mxu0 0
      %582 = vmatmul.mubr.bf16.gmra.mrb[0].mxu0 %v478
      %v583 = vpop.f32.mrb[0].mxu0
      %v584 = vadd.f32 0.0, %v583
      %v585 = vpop.f32.mrb[0].mxu0
      %v586 = vpop.f32.mrb[0].mxu0
      %v587 = vadd.f32 0.0, %v586
      %v588 = vpop.f32.mrb[0].mxu0
      %589 = vmatprep.mubr.bf16.mxu0 0
      %590 = vmatmul.mubr.bf16.gmra.mrb[0].mxu0 %v481
      %v591 = vpop.f32.mrb[0].mxu0
      %v592 = vadd.f32 0.0, %v591
      %v593 = vpop.f32.mrb[0].mxu0
      %v594 = vpop.f32.mrb[0].mxu0
      %v595 = vadd.f32 0.0, %v594
      %v596 = vpop.f32.mrb[0].mxu0
      %597 = vmatprep.mubr.bf16.mxu0 0
      %598 = vmatmul.mubr.bf16.gmra.mrb[0].mxu0 %v484
      %v599 = vpop.f32.mrb[0].mxu0
      %v600 = vadd.f32 0.0, %v599
      %v601 = vpop.f32.mrb[0].mxu0
      %v602 = vpop.f32.mrb[0].mxu0
      %v603 = vadd.f32 0.0, %v602
      %v604 = vpop.f32.mrb[0].mxu0
      %605 = vmatprep.mubr.bf16.mxu0 0
      %606 = vmatmul.mubr.bf16.gmra.mrb[0].mxu0 %v487
      %v607 = vpop.f32.mrb[0].mxu0
      %v608 = vadd.f32 0.0, %v607
      %v609 = vpop.f32.mrb[0].mxu0
      %v610 = vpop.f32.mrb[0].mxu0
      %v611 = vadd.f32 0.0, %v610
      %v612 = vpop.f32.mrb[0].mxu0
      %613 = vmatprep.mubr.bf16.mxu0 0
      %614 = vmatmul.mubr.bf16.gmra.mrb[0].mxu0 %v490
      %v615 = vpop.f32.mrb[0].mxu0
      %v616 = vadd.f32 0.0, %v615
      %v617 = vpop.f32.mrb[0].mxu0
      %v618 = vpop.f32.mrb[0].mxu0
      %v619 = vadd.f32 0.0, %v618
      %v620 = vpop.f32.mrb[0].mxu0
      %621 = vmatprep.mubr.bf16.mxu0 0
      %622 = vmatmul.mubr.bf16.gmra.mrb[0].mxu0 %v493
      %v623 = vpop.f32.mrb[0].mxu0
      %v624 = vadd.f32 0.0, %v623
      %v625 = vpop.f32.mrb[0].mxu0
      %v626 = vpop.f32.mrb[0].mxu0
      %v627 = vadd.f32 0.0, %v626
      %v628 = vpop.f32.mrb[0].mxu0
      %629 = vmatprep.mubr.bf16.mxu0 0
      %630 = vmatmul.mubr.bf16.gmra.mrb[0].mxu0 %v496
      %v631 = vpop.f32.mrb[0].mxu0
      %v632 = vadd.f32 0.0, %v631
      %v633 = vpop.f32.mrb[0].mxu0
      %v634 = vpop.f32.mrb[0].mxu0
      %v635 = vadd.f32 0.0, %v634
      %v636 = vpop.f32.mrb[0].mxu0
      %637 = vmatprep.mubr.bf16.mxu0 0
      %638 = vmatmul.mubr.bf16.gmra.mrb[0].mxu0 %v499
      %v639 = vpop.f32.mrb[0].mxu0
      %v640 = vadd.f32 0.0, %v639
      %v641 = vpop.f32.mrb[0].mxu0
      %v642 = vpop.f32.mrb[0].mxu0
      %v643 = vadd.f32 0.0, %v642
      %v644 = vpop.f32.mrb[0].mxu0
      %645 = vmatprep.mubr.bf16.mxu0 0
      %646 = vmatmul.mubr.bf16.gmra.mrb[0].mxu0 %v502
      %v647 = vpop.f32.mrb[0].mxu0
      %v648 = vadd.f32 0.0, %v647
      %v649 = vpop.f32.mrb[0].mxu0
      %v650 = vpop.f32.mrb[0].mxu0
      %v651 = vadd.f32 0.0, %v650
      %v652 = vpop.f32.mrb[0].mxu0
      %653 = vmatprep.mubr.bf16.mxu0 0
      %654 = vmatmul.mubr.bf16.gmra.mrb[0].mxu0 %v505
      %v655 = vpop.f32.mrb[0].mxu0
      %v656 = vadd.f32 0.0, %v655
      %v657 = vpop.f32.mrb[0].mxu0
      %v658 = vpop.f32.mrb[0].mxu0
      %v659 = vadd.f32 0.0, %v658
      %v660 = vpop.f32.mrb[0].mxu0
      %661 = vmatprep.mubr.bf16.mxu0 0
      %662 = vmatmul.mubr.bf16.gmra.mrb[0].mxu0 %v508
      %v663 = vpop.f32.mrb[0].mxu0
      %v664 = vadd.f32 0.0, %v663
      %v665 = vpop.f32.mrb[0].mxu0
      %v666 = vpop.f32.mrb[0].mxu0
      %v667 = vadd.f32 0.0, %v666
      %v668 = vpop.f32.mrb[0].mxu0
      %669 = vmatprep.mubr.bf16.mxu0 0
      %670 = vmatmul.mubr.bf16.gmra.mrb[0].mxu0 %v511
      %v671 = vpop.f32.mrb[0].mxu0
      %v672 = vadd.f32 0.0, %v671
      %v673 = vpop.f32.mrb[0].mxu0
      %v674 = vpop.f32.mrb[0].mxu0
      %v675 = vadd.f32 0.0, %v674
      %v676 = vpop.f32.mrb[0].mxu0
      %677 = vdwg.mxu0
      %v678 = vadd.f32 %v300, %v552
      %v679 = vadd.f32 %v301, %v555
      %v680 = vadd.f32 %v302, %v560
      %v681 = vadd.f32 %v303, %v563
      %v682 = vadd.f32 %v304, %v568
      %v683 = vadd.f32 %v305, %v571
      %v684 = vadd.f32 %v306, %v576
      %v685 = vadd.f32 %v307, %v579
      %v686 = vadd.f32 %v308, %v584
      %v687 = vadd.f32 %v309, %v587
      %v688 = vadd.f32 %v310, %v592
      %v689 = vadd.f32 %v311, %v595
      %v690 = vadd.f32 %v312, %v600
      %v691 = vadd.f32 %v313, %v603
      %v692 = vadd.f32 %v314, %v608
      %v693 = vadd.f32 %v315, %v611
      %v694 = vadd.f32 %v316, %v616
      %v695 = vadd.f32 %v317, %v619
      %v696 = vadd.f32 %v318, %v624
      %v697 = vadd.f32 %v319, %v627
      %v698 = vadd.f32 %v320, %v632
      %v699 = vadd.f32 %v321, %v635
      %v700 = vadd.f32 %v322, %v640
      %v701 = vadd.f32 %v323, %v643
      %v702 = vadd.f32 %v324, %v648
      %v703 = vadd.f32 %v325, %v651
      %v704 = vadd.f32 %v326, %v656
      %v705 = vadd.f32 %v327, %v659
      %v706 = vadd.f32 %v328, %v664
      %v707 = vadd.f32 %v329, %v667
      %v708 = vadd.f32 %v330, %v672
      %v709 = vadd.f32 %v331, %v675
      %710 = vst [vmem:[#allocation2] sm:$0xff] %v678
      %711 = vst [vmem:[#allocation2 + $0x8] sm:$0xff] %v679
      %712 = vst [vmem:[#allocation2 + $0x10] sm:$0xff] %v680
      %713 = vst [vmem:[#allocation2 + $0x18] sm:$0xff] %v681
      %714 = vst [vmem:[#allocation2 + $0x20] sm:$0xff] %v682
      %715 = vst [vmem:[#allocation2 + $0x28] sm:$0xff] %v683
      %716 = vst [vmem:[#allocation2 + $0x30] sm:$0xff] %v684
      %717 = vst [vmem:[#allocation2 + $0x38] sm:$0xff] %v685
      %718 = vst [vmem:[#allocation2 + $0x40] sm:$0xff] %v686
      %719 = vst [vmem:[#allocation2 + $0x48] sm:$0xff] %v687
      %720 = vst [vmem:[#allocation2 + $0x50] sm:$0xff] %v688
      %721 = vst [vmem:[#allocation2 + $0x58] sm:$0xff] %v689
      %722 = vst [vmem:[#allocation2 + $0x60] sm:$0xff] %v690
      %723 = vst [vmem:[#allocation2 + $0x68] sm:$0xff] %v691
      %724 = vst [vmem:[#allocation2 + $0x70] sm:$0xff] %v692
      %725 = vst [vmem:[#allocation2 + $0x78] sm:$0xff] %v693
      %726 = vst [vmem:[#allocation2 + $0x80] sm:$0xff] %v694
      %727 = vst [vmem:[#allocation2 + $0x88] sm:$0xff] %v695
      %728 = vst [vmem:[#allocation2 + $0x90] sm:$0xff] %v696
      %729 = vst [vmem:[#allocation2 + $0x98] sm:$0xff] %v697
      %730 = vst [vmem:[#allocation2 + $0xa0] sm:$0xff] %v698
      %731 = vst [vmem:[#allocation2 + $0xa8] sm:$0xff] %v699
      %732 = vst [vmem:[#allocation2 + $0xb0] sm:$0xff] %v700
      %733 = vst [vmem:[#allocation2 + $0xb8] sm:$0xff] %v701
      %734 = vst [vmem:[#allocation2 + $0xc0] sm:$0xff] %v702
      %735 = vst [vmem:[#allocation2 + $0xc8] sm:$0xff] %v703
      %736 = vst [vmem:[#allocation2 + $0xd0] sm:$0xff] %v704
      %737 = vst [vmem:[#allocation2 + $0xd8] sm:$0xff] %v705
      %738 = vst [vmem:[#allocation2 + $0xe0] sm:$0xff] %v706
      %739 = vst [vmem:[#allocation2 + $0xe8] sm:$0xff] %v707
      %740 = vst [vmem:[#allocation2 + $0xf0] sm:$0xff] %v708
      %741 = vst [vmem:[#allocation2 + $0xf8] sm:$0xff] %v709
      // Predicated region
      $region33: #{up_forward.4} parent=27 // pred_check
        %p742 = pneg %p264
      $region34: #{up_forward.4} parent=27 // pred_check_branch
        %744 = sbr.rel (%p742) target = $region36
      $region35: #{up_forward.4} parent=27 // pred_region
        %v745 = vld [vmem:[#allocation2] sm:$0xff]
        %v746 = vld [vmem:[#allocation2 + $0x8] sm:$0xff]
        %v747 = vld [vmem:[#allocation2 + $0x10] sm:$0xff]
        %v748 = vld [vmem:[#allocation2 + $0x18] sm:$0xff]
        %v749 = vld [vmem:[#allocation2 + $0x20] sm:$0xff]
        %v750 = vld [vmem:[#allocation2 + $0x28] sm:$0xff]
        %v751 = vld [vmem:[#allocation2 + $0x30] sm:$0xff]
        %v752 = vld [vmem:[#allocation2 + $0x38] sm:$0xff]
        %v753 = vld [vmem:[#allocation2 + $0x40] sm:$0xff]
        %v754 = vld [vmem:[#allocation2 + $0x48] sm:$0xff]
        %v755 = vld [vmem:[#allocation2 + $0x50] sm:$0xff]
        %v756 = vld [vmem:[#allocation2 + $0x58] sm:$0xff]
        %v757 = vld [vmem:[#allocation2 + $0x60] sm:$0xff]
        %v758 = vld [vmem:[#allocation2 + $0x68] sm:$0xff]
        %v759 = vld [vmem:[#allocation2 + $0x70] sm:$0xff]
        %v760 = vld [vmem:[#allocation2 + $0x78] sm:$0xff]
        %v761 = vld [vmem:[#allocation2 + $0x80] sm:$0xff]
        %v762 = vld [vmem:[#allocation2 + $0x88] sm:$0xff]
        %v763 = vld [vmem:[#allocation2 + $0x90] sm:$0xff]
        %v764 = vld [vmem:[#allocation2 + $0x98] sm:$0xff]
        %v765 = vld [vmem:[#allocation2 + $0xa0] sm:$0xff]
        %v766 = vld [vmem:[#allocation2 + $0xa8] sm:$0xff]
        %v767 = vld [vmem:[#allocation2 + $0xb0] sm:$0xff]
        %v768 = vld [vmem:[#allocation2 + $0xb8] sm:$0xff]
        %v769 = vld [vmem:[#allocation2 + $0xc0] sm:$0xff]
        %v770 = vld [vmem:[#allocation2 + $0xc8] sm:$0xff]
        %v771 = vld [vmem:[#allocation2 + $0xd0] sm:$0xff]
        %v772 = vld [vmem:[#allocation2 + $0xd8] sm:$0xff]
        %v773 = vld [vmem:[#allocation2 + $0xe0] sm:$0xff]
        %v774 = vld [vmem:[#allocation2 + $0xe8] sm:$0xff]
        %v775 = vld [vmem:[#allocation2 + $0xf0] sm:$0xff]
        %v776 = vld [vmem:[#allocation2 + $0xf8] sm:$0xff]
        %v777 = vpack.c.bf16 %v746, %v745
        %v778 = vpack.c.bf16 %v748, %v747
        %v779 = vpack.c.bf16 %v750, %v749
        %v780 = vpack.c.bf16 %v752, %v751
        %v781 = vpack.c.bf16 %v754, %v753
        %v782 = vpack.c.bf16 %v756, %v755
        %v783 = vpack.c.bf16 %v758, %v757
        %v784 = vpack.c.bf16 %v760, %v759
        %v785 = vpack.c.bf16 %v762, %v761
        %v786 = vpack.c.bf16 %v764, %v763
        %v787 = vpack.c.bf16 %v766, %v765
        %v788 = vpack.c.bf16 %v768, %v767
        %v789 = vpack.c.bf16 %v770, %v769
        %v790 = vpack.c.bf16 %v772, %v771
        %v791 = vpack.c.bf16 %v774, %v773
        %v792 = vpack.c.bf16 %v776, %v775
        %v809 = vunpack.c.l.b16 %v777
        %v810 = vunpack.c.h.b16 %v777
        %v811 = vunpack.c.l.b16 %v778
        %v812 = vunpack.c.h.b16 %v778
        %v813 = vunpack.c.l.b16 %v779
        %v814 = vunpack.c.h.b16 %v779
        %v815 = vunpack.c.l.b16 %v780
        %v816 = vunpack.c.h.b16 %v780
        %v817 = vunpack.c.l.b16 %v781
        %v818 = vunpack.c.h.b16 %v781
        %v819 = vunpack.c.l.b16 %v782
        %v820 = vunpack.c.h.b16 %v782
        %v821 = vunpack.c.l.b16 %v783
        %v822 = vunpack.c.h.b16 %v783
        %v823 = vunpack.c.l.b16 %v784
        %v824 = vunpack.c.h.b16 %v784
        %v825 = vunpack.c.l.b16 %v785
        %v826 = vunpack.c.h.b16 %v785
        %v827 = vunpack.c.l.b16 %v786
        %v828 = vunpack.c.h.b16 %v786
        %v829 = vunpack.c.l.b16 %v787
        %v830 = vunpack.c.h.b16 %v787
        %v831 = vunpack.c.l.b16 %v788
        %v832 = vunpack.c.h.b16 %v788
        %v833 = vunpack.c.l.b16 %v789
        %v834 = vunpack.c.h.b16 %v789
        %v835 = vunpack.c.l.b16 %v790
        %v836 = vunpack.c.h.b16 %v790
        %v837 = vunpack.c.l.b16 %v791
        %v838 = vunpack.c.h.b16 %v791
        %v839 = vunpack.c.l.b16 %v792
        %v840 = vunpack.c.h.b16 %v792
        %v841 = vpack.c.b16 %v809, %v809
        %v842 = vpack.c.b16 %v810, %v810
        %v843 = vpack.c.b16 %v811, %v811
        %v844 = vpack.c.b16 %v812, %v812
        %v845 = vpack.c.b16 %v813, %v813
        %v846 = vpack.c.b16 %v814, %v814
        %v847 = vpack.c.b16 %v815, %v815
        %v848 = vpack.c.b16 %v816, %v816
        %v849 = vpack.c.b16 %v817, %v817
        %v850 = vpack.c.b16 %v818, %v818
        %v851 = vpack.c.b16 %v819, %v819
        %v852 = vpack.c.b16 %v820, %v820
        %v853 = vpack.c.b16 %v821, %v821
        %v854 = vpack.c.b16 %v822, %v822
        %v855 = vpack.c.b16 %v823, %v823
        %v856 = vpack.c.b16 %v824, %v824
        %v857 = vpack.c.b16 %v825, %v825
        %v858 = vpack.c.b16 %v826, %v826
        %v859 = vpack.c.b16 %v827, %v827
        %v860 = vpack.c.b16 %v828, %v828
        %v861 = vpack.c.b16 %v829, %v829
        %v862 = vpack.c.b16 %v830, %v830
        %v863 = vpack.c.b16 %v831, %v831
        %v864 = vpack.c.b16 %v832, %v832
        %v865 = vpack.c.b16 %v833, %v833
        %v866 = vpack.c.b16 %v834, %v834
        %v867 = vpack.c.b16 %v835, %v835
        %v868 = vpack.c.b16 %v836, %v836
        %v869 = vpack.c.b16 %v837, %v837
        %v870 = vpack.c.b16 %v838, %v838
        %v871 = vpack.c.b16 %v839, %v839
        %v872 = vpack.c.b16 %v840, %v840
        %905 = vst [vmem:[%s255] sm:$0xf] %v841
        %906 = vst [vmem:[%s255 + $0x4] sm:$0xf] %v842
        %907 = vst [vmem:[%s255 + $0x8] sm:$0xf] %v843
        %908 = vst [vmem:[%s255 + $0xc] sm:$0xf] %v844
        %909 = vst [vmem:[%s255 + $0x10] sm:$0xf] %v845
        %910 = vst [vmem:[%s255 + $0x14] sm:$0xf] %v846
        %911 = vst [vmem:[%s255 + $0x18] sm:$0xf] %v847
        %912 = vst [vmem:[%s255 + $0x1c] sm:$0xf] %v848
        %913 = vst [vmem:[%s255 + $0x20] sm:$0xf] %v849
        %914 = vst [vmem:[%s255 + $0x24] sm:$0xf] %v850
        %915 = vst [vmem:[%s255 + $0x28] sm:$0xf] %v851
        %916 = vst [vmem:[%s255 + $0x2c] sm:$0xf] %v852
        %917 = vst [vmem:[%s255 + $0x30] sm:$0xf] %v853
        %918 = vst [vmem:[%s255 + $0x34] sm:$0xf] %v854
        %919 = vst [vmem:[%s255 + $0x38] sm:$0xf] %v855
        %920 = vst [vmem:[%s255 + $0x3c] sm:$0xf] %v856
        %921 = vst [vmem:[%s255 + $0x40] sm:$0xf] %v857
        %922 = vst [vmem:[%s255 + $0x44] sm:$0xf] %v858
        %923 = vst [vmem:[%s255 + $0x48] sm:$0xf] %v859
        %924 = vst [vmem:[%s255 + $0x4c] sm:$0xf] %v860
        %925 = vst [vmem:[%s255 + $0x50] sm:$0xf] %v861
        %926 = vst [vmem:[%s255 + $0x54] sm:$0xf] %v862
        %927 = vst [vmem:[%s255 + $0x58] sm:$0xf] %v863
        %928 = vst [vmem:[%s255 + $0x5c] sm:$0xf] %v864
        %929 = vst [vmem:[%s255 + $0x60] sm:$0xf] %v865
        %930 = vst [vmem:[%s255 + $0x64] sm:$0xf] %v866
        %931 = vst [vmem:[%s255 + $0x68] sm:$0xf] %v867
        %932 = vst [vmem:[%s255 + $0x6c] sm:$0xf] %v868
        %933 = vst [vmem:[%s255 + $0x70] sm:$0xf] %v869
        %934 = vst [vmem:[%s255 + $0x74] sm:$0xf] %v870
        %935 = vst [vmem:[%s255 + $0x78] sm:$0xf] %v871
        %936 = vst [vmem:[%s255 + $0x7c] sm:$0xf] %v872
        %v937 = vadd.f32 %v745, %v746
        %v938 = vadd.f32 %v937, %v747
        %v939 = vadd.f32 %v938, %v748
        %v940 = vadd.f32 %v939, %v749
        %v941 = vadd.f32 %v940, %v750
        %v942 = vadd.f32 %v941, %v751
        %v943 = vadd.f32 %v942, %v752
        %v944 = vadd.f32 %v943, %v753
        %v945 = vadd.f32 %v944, %v754
        %v946 = vadd.f32 %v945, %v755
        %v947 = vadd.f32 %v946, %v756
        %v948 = vadd.f32 %v947, %v757
        %v949 = vadd.f32 %v948, %v758
        %v950 = vadd.f32 %v949, %v759
        %v951 = vadd.f32 %v950, %v760
        %v952 = vadd.f32 %v951, %v761
        %v953 = vadd.f32 %v952, %v762
        %v954 = vadd.f32 %v953, %v763
        %v955 = vadd.f32 %v954, %v764
        %v956 = vadd.f32 %v955, %v765
        %v957 = vadd.f32 %v956, %v766
        %v958 = vadd.f32 %v957, %v767
        %v959 = vadd.f32 %v958, %v768
        %v960 = vadd.f32 %v959, %v769
        %v961 = vadd.f32 %v960, %v770
        %v962 = vadd.f32 %v961, %v771
        %v963 = vadd.f32 %v962, %v772
        %v964 = vadd.f32 %v963, %v773
        %v965 = vadd.f32 %v964, %v774
        %v966 = vadd.f32 %v965, %v775
        %v967 = vadd.f32 %v966, %v776
        %v968 = vrot.slane %v967, 4
        %v969 = vadd.f32 %v967, %v968
        %v970 = vrot.slane %v969, 2
        %v971 = vadd.f32 %v969, %v970
        %v972 = vrot.slane %v971, 1
        %v973 = vadd.f32 %v971, %v972
        %974 = vst [vmem:[%s259] sm:$0x1] %v973
        %v975 = vmul.f32 %v745, %v745
        %v976 = vmul.f32 %v746, %v746
        %v977 = vmul.f32 %v747, %v747
        %v978 = vmul.f32 %v748, %v748
        %v979 = vmul.f32 %v749, %v749
        %v980 = vmul.f32 %v750, %v750
        %v981 = vmul.f32 %v751, %v751
        %v982 = vmul.f32 %v752, %v752
        %v983 = vmul.f32 %v753, %v753
        %v984 = vmul.f32 %v754, %v754
        %v985 = vmul.f32 %v755, %v755
        %v986 = vmul.f32 %v756, %v756
        %v987 = vmul.f32 %v757, %v757
        %v988 = vmul.f32 %v758, %v758
        %v989 = vmul.f32 %v759, %v759
        %v990 = vmul.f32 %v760, %v760
        %v991 = vmul.f32 %v761, %v761
        %v992 = vmul.f32 %v762, %v762
        %v993 = vmul.f32 %v763, %v763
        %v994 = vmul.f32 %v764, %v764
        %v995 = vmul.f32 %v765, %v765
        %v996 = vmul.f32 %v766, %v766
        %v997 = vmul.f32 %v767, %v767
        %v998 = vmul.f32 %v768, %v768
        %v999 = vmul.f32 %v769, %v769
        %v1000 = vmul.f32 %v770, %v770
        %v1001 = vmul.f32 %v771, %v771
        %v1002 = vmul.f32 %v772, %v772
        %v1003 = vmul.f32 %v773, %v773
        %v1004 = vmul.f32 %v774, %v774
        %v1005 = vmul.f32 %v775, %v775
        %v1006 = vmul.f32 %v776, %v776
        %v1007 = vadd.f32 %v975, %v976
        %v1008 = vadd.f32 %v1007, %v977
        %v1009 = vadd.f32 %v1008, %v978
        %v1010 = vadd.f32 %v1009, %v979
        %v1011 = vadd.f32 %v1010, %v980
        %v1012 = vadd.f32 %v1011, %v981
        %v1013 = vadd.f32 %v1012, %v982
        %v1014 = vadd.f32 %v1013, %v983
        %v1015 = vadd.f32 %v1014, %v984
        %v1016 = vadd.f32 %v1015, %v985
        %v1017 = vadd.f32 %v1016, %v986
        %v1018 = vadd.f32 %v1017, %v987
        %v1019 = vadd.f32 %v1018, %v988
        %v1020 = vadd.f32 %v1019, %v989
        %v1021 = vadd.f32 %v1020, %v990
        %v1022 = vadd.f32 %v1021, %v991
        %v1023 = vadd.f32 %v1022, %v992
        %v1024 = vadd.f32 %v1023, %v993
        %v1025 = vadd.f32 %v1024, %v994
        %v1026 = vadd.f32 %v1025, %v995
        %v1027 = vadd.f32 %v1026, %v996
        %v1028 = vadd.f32 %v1027, %v997
        %v1029 = vadd.f32 %v1028, %v998
        %v1030 = vadd.f32 %v1029, %v999
        %v1031 = vadd.f32 %v1030, %v1000
        %v1032 = vadd.f32 %v1031, %v1001
        %v1033 = vadd.f32 %v1032, %v1002
        %v1034 = vadd.f32 %v1033, %v1003
        %v1035 = vadd.f32 %v1034, %v1004
        %v1036 = vadd.f32 %v1035, %v1005
        %v1037 = vadd.f32 %v1036, %v1006
        %v1038 = vrot.slane %v1037, 4
        %v1039 = vadd.f32 %v1037, %v1038
        %v1040 = vrot.slane %v1039, 2
        %v1041 = vadd.f32 %v1039, %v1040
        %v1042 = vrot.slane %v1041, 1
        %v1043 = vadd.f32 %v1041, %v1042
        %1044 = vst [vmem:[%s262] sm:$0x1] %v1043
      $region36: #{up_forward.4} parent=27 // pred_fallthru
        _
      %s1045 = smul.u32 32, %s20
      %p1046 = scmp.lt.s32.totalorder %s1045, 63
      %s1047 = scalar_select %p1046, %s1045, 63
      %s1048 = smul.addr %s1047, 4
      %s1049 = scalar_lea.vmem %s2, %s1048
      %p1050 = scmp.lt.s32.totalorder %s20, 1
      %s1051 = scalar_select %p1050, %s20, 1
      %s1052 = scalar_lea.vmem %s3, %s1051
      %p1053 = scmp.lt.s32.totalorder %s20, 1
      %s1054 = scalar_select %p1053, %s20, 1
      %s1055 = scalar_lea.vmem %s4, %s1054
      // Predicated region
      $region37: #{up_forward.4} parent=27 // pred_check
        %p1056 = pneg %p100
      $region38: #{up_forward.4} parent=27 // pred_check_branch
        %1058 = sbr.rel (%p1056) target = $region40
      $region39: #{up_forward.4} parent=27 // pred_region
        %s1059 = smul.u32 32, %s20
      $region40: #{up_forward.4} parent=27 // pred_fallthru
        _
      // Predicated region
      $region41: #{up_forward.4} parent=27 // pred_check
        %p1060 = pneg %p126
      $region42: #{up_forward.4} parent=27 // pred_check_branch
        %1062 = sbr.rel (%p1060) target = $region44
      $region43: #{up_forward.4} parent=27 // pred_region
        _
      $region44: #{up_forward.4} parent=27 // pred_fallthru
        _
      // Predicated region
      $region45: #{up_forward.4} parent=27 // pred_check
        %p1063 = pneg %p152
      $region46: #{up_forward.4} parent=27 // pred_check_branch
        %1065 = sbr.rel (%p1063) target = $region48
      $region47: #{up_forward.4} parent=27 // pred_region
        _
      $region48: #{up_forward.4} parent=27 // pred_fallthru
        _
    $region28: #{up_forward.4} parent=5 // pred_fallthru
      _
    %p1066 = scmp.le.s32.totalorder 2, %s11
    // Predicated region
    $region49: #{up_forward.4} parent=5 // pred_check
      %p1067 = pneg %p1066
    $region50: #{up_forward.4} parent=5 // pred_check_branch
      %1069 = sbr.rel (%p1067) target = $region52
    $region51: #{up_forward.4} parent=5 // pred_region
      %s1070 = ssub.s32 %s11, 2
      // Predicated region
      $region53: #{up_forward.4} parent=51 // pred_check
        %p1071 = pneg %p106
      $region54: #{up_forward.4} parent=51 // pred_check_branch
        %1073 = sbr.rel (%p1071) target = $region56
      $region55: #{up_forward.4} parent=51 // pred_region
        %s1074 = smul.u32 32, %s22
        %p1075 = scmp.lt.s32.totalorder %s1074, 63
        %s1076 = scalar_select %p1075, %s1074, 63
        %s1077 = smul.addr %s1076, 4
        %s1078 = scalar_lea.vmem %s2, %s1077
      $region56: #{up_forward.4} parent=51 // pred_fallthru
        _
      // Predicated region
      $region57: #{up_forward.4} parent=51 // pred_check
        %p1079 = pneg %p132
      $region58: #{up_forward.4} parent=51 // pred_check_branch
        %1081 = sbr.rel (%p1079) target = $region60
      $region59: #{up_forward.4} parent=51 // pred_region
        %p1082 = scmp.lt.s32.totalorder %s22, 1
        %s1083 = scalar_select %p1082, %s22, 1
        %s1084 = scalar_lea.vmem %s3, %s1083
      $region60: #{up_forward.4} parent=51 // pred_fallthru
        _
      // Predicated region
      $region61: #{up_forward.4} parent=51 // pred_check
        %p1085 = pneg %p158
      $region62: #{up_forward.4} parent=51 // pred_check_branch
        %1087 = sbr.rel (%p1085) target = $region64
      $region63: #{up_forward.4} parent=51 // pred_region
        %p1088 = scmp.lt.s32.totalorder %s22, 1
        %s1089 = scalar_select %p1088, %s22, 1
        %s1090 = scalar_lea.vmem %s4, %s1089
      $region64: #{up_forward.4} parent=51 // pred_fallthru
        _
    $region52: #{up_forward.4} parent=5 // pred_fallthru
      _
  $region6: #{up_forward.4} parent=0 // loop_footer
    %s15 = sadd.s32 1, %s11
  $region7: #{up_forward.4} parent=0 // loop_footer_branch
    %10 = sbr.rel target = $region3
  $region8: #{up_forward.4} parent=0 // loop_exit
    _

</llo_original>
